<compile_context>
chip_gen: v7x
topology: tpu7x:2x2x1
jax: 0.10.0
libtpu: 0.0.40
codegen_flags: <defaults>
</compile_context>

<pallas_src>
import functools

import jax
import jax.numpy as jnp
from jax.experimental import pallas as pl
from jax.experimental.pallas import tpu as pltpu

IN_DIM = 2881
IN_PAD = 2944            # 23 * 128: lane-aligned K for the first matmul
H1 = 256
H2 = 256
H3 = 128
OUT_DIM = 4
DEFAULT_BATCH_TILE = 512  # bf16 (512, 2944) x tile ~= 2.9 MiB per buffer


def _cdiv(a, b):
    return -(-a // b)


def _round_up(n, m):
    return _cdiv(n, m) * m


def _mlp_kernel(x_ref, w1_ref, b1_ref, w2_ref, b2_ref, w3_ref, b3_ref,
                w4_ref, b4_ref, o_ref):
    # x arrives as bf16; all matmuls are bf16 x bf16 on the MXU with f32
    # accumulation.  Bias add + ReLU stay f32 on the VPU (free under the
    # DMA/MXU roofline).
    h = jnp.dot(x_ref[...], w1_ref[...],
                preferred_element_type=jnp.float32) + b1_ref[...]
    h = jnp.maximum(h, 0.0)

    h = jnp.dot(h.astype(jnp.bfloat16), w2_ref[...],
                preferred_element_type=jnp.float32) + b2_ref[...]
    h = jnp.maximum(h, 0.0)

    h = jnp.dot(h.astype(jnp.bfloat16), w3_ref[...],
                preferred_element_type=jnp.float32) + b3_ref[...]
    h = jnp.maximum(h, 0.0)

    logits = jnp.dot(h.astype(jnp.bfloat16), w4_ref[...],
                     preferred_element_type=jnp.float32) + b4_ref[...]
    o_ref[...] = logits.astype(o_ref.dtype)


def prepare_params(params):
    """One-time conversion of f32 params to the kernel's streaming layout:
    w1 padded 2881 -> 2944 along K (zero rows, result unchanged) and all
    weights cast to bf16; biases kept f32.  Call once, reuse every forward."""
    return {
        "w1": jnp.pad(jnp.asarray(params["w1"], jnp.float32),
                      ((0, IN_PAD - IN_DIM), (0, 0))).astype(jnp.bfloat16),
        "w2": jnp.asarray(params["w2"]).astype(jnp.bfloat16),
        "w3": jnp.asarray(params["w3"]).astype(jnp.bfloat16),
        "w4": jnp.asarray(params["w4"]).astype(jnp.bfloat16),
        "b1": jnp.asarray(params["b1"], jnp.float32),
        "b2": jnp.asarray(params["b2"], jnp.float32),
        "b3": jnp.asarray(params["b3"], jnp.float32),
        "b4": jnp.asarray(params["b4"], jnp.float32),
    }


def _pick_batch_tiling(b, batch_tile):
    """Split the batch evenly into the fewest tiles <= batch_tile, each a
    multiple of 8 (minimizes padding, e.g. 300 -> 2x152 instead of 1x512).
    Force >=2 grid steps when the batch allows so both v7x TensorCores get
    work under the "parallel" batch axis."""
    bp8 = _round_up(max(b, 1), 8)
    n_tiles = _cdiv(bp8, batch_tile)
    if n_tiles == 1 and bp8 >= 16:
        n_tiles = 2
    tb = _round_up(_cdiv(bp8, n_tiles), 8)
    bp = tb * n_tiles
    return tb, bp


@functools.partial(jax.jit, static_argnames=("batch_tile",))
def neural_net_forward(x, prepared, *, batch_tile=DEFAULT_BATCH_TILE):
    """x: (B, 2881) (or any shape flattening to 2881 features).
    prepared: output of prepare_params().  Returns (B, 4) f32 logits."""
    b = x.shape[0]
    x = x.reshape(b, -1)                                   # nn.Flatten
    feat = x.shape[1]

    tb, bp = _pick_batch_tiling(b, batch_tile)

    # bf16 cast + feature pad (2881 -> 2944) + batch pad fused into one XLA
    # op: halves the dominant HBM stream vs. materializing a padded f32 copy.
    x = jnp.pad(x.astype(jnp.bfloat16),
                ((0, bp - b), (0, IN_PAD - feat)))

    # Constant block index -> weights/biases stay resident in VMEM across
    # batch tiles (fetched once, never re-DMA'd).
    resident = lambda a: pl.BlockSpec(a.shape, lambda i: (0,) * a.ndim)

    w1, w2, w3, w4 = prepared["w1"], prepared["w2"], prepared["w3"], prepared["w4"]
    b1, b2, b3, b4 = prepared["b1"], prepared["b2"], prepared["b3"], prepared["b4"]

    out = pl.pallas_call(
        _mlp_kernel,
        out_shape=jax.ShapeDtypeStruct((bp, OUT_DIM), jnp.float32),
        grid=(bp // tb,),
        in_specs=[pl.BlockSpec((tb, IN_PAD), lambda i: (i, 0)),
                  resident(w1), resident(b1),
                  resident(w2), resident(b2),
                  resident(w3), resident(b3),
                  resident(w4), resident(b4)],
        out_specs=pl.BlockSpec((tb, OUT_DIM), lambda i: (i, 0)),
        compiler_params=pltpu.CompilerParams(
            dimension_semantics=("parallel",),
            vmem_limit_bytes=32 << 20),
    )(x, w1, b1, w2, b2, w3, b3, w4, b4)

    return out[:b]


def init_params(key):
    """Deterministic init mirroring torch.nn.Linear default:
    U(-1/sqrt(fan_in), 1/sqrt(fan_in)) for both weight and bias."""
    dims = [(IN_DIM, H1), (H1, H2), (H2, H3), (H3, OUT_DIM)]
    params = {}
    keys = jax.random.split(key, 2 * len(dims))
    for i, (fan_in, fan_out) in enumerate(dims):
        bound = 1.0 / jnp.sqrt(fan_in)
        w = jax.random.uniform(keys[2 * i], (fan_in, fan_out),
                               minval=-bound, maxval=bound, dtype=jnp.float32)
        bias = jax.random.uniform(keys[2 * i + 1], (1, fan_out),
                                  minval=-bound, maxval=bound, dtype=jnp.float32)
        params[f"w{i + 1}"] = w
        params[f"b{i + 1}"] = bias
    return params


def _reference_forward(x, params):
    """f32 reference using bf16-rounded weights (matches the kernel's weight
    quantization; remaining difference is only the bf16 cast of activations
    at the MXU operands, which stays inside the asserted tolerance)."""
    q = lambda w: w.astype(jnp.bfloat16).astype(jnp.float32)
    h = x.reshape(x.shape[0], -1)
    h = jnp.maximum(h @ q(params["w1"]) + params["b1"], 0.0)
    h = jnp.maximum(h @ q(params["w2"]) + params["b2"], 0.0)
    h = jnp.maximum(h @ q(params["w3"]) + params["b3"], 0.0)
    return h @ q(params["w4"]) + params["b4"]


if __name__ == "__main__":
    key = jax.random.PRNGKey(0)
    k_params, k_x1, k_x2 = jax.random.split(key, 3)

    params = init_params(k_params)
    prepared = prepare_params(params)   # one-time weight pad + bf16 cast

    # Small batch (Flatten is identity on an already-flat (B, 2881) input).
    x_small = jax.random.normal(k_x1, (2, IN_DIM), dtype=jnp.float32)
    out_small = jax.block_until_ready(neural_net_forward(x_small, prepared))
    ref_small = _reference_forward(x_small, params)
    assert out_small.shape == (2, OUT_DIM), out_small.shape
    assert jnp.allclose(out_small, ref_small, atol=2e-2, rtol=2e-2), \
        float(jnp.max(jnp.abs(out_small - ref_small)))

    # Medium batch exercising the even-split multi-tile grid (300 -> 2x152).
    x_big = jax.random.normal(k_x2, (300, IN_DIM), dtype=jnp.float32)
    out_big = jax.block_until_ready(neural_net_forward(x_big, prepared))
    ref_big = _reference_forward(x_big, params)
    assert out_big.shape == (300, OUT_DIM), out_big.shape
    assert jnp.allclose(out_big, ref_big, atol=2e-2, rtol=2e-2), \
        float(jnp.max(jnp.abs(out_big - ref_big)))

    print("KERNEL_OK")
</pallas_src>

<mosaic_0001>
module attributes {stable_mosaic.version = 11 : i64} {
  func.func @_mlp_kernel(%arg0: i32, %arg1: memref<8x2944xbf16, #tpu.memory_space<vmem>>, %arg2: memref<2944x256xbf16, #tpu.memory_space<vmem>>, %arg3: memref<1x256xf32, #tpu.memory_space<vmem>>, %arg4: memref<256x256xbf16, #tpu.memory_space<vmem>>, %arg5: memref<1x256xf32, #tpu.memory_space<vmem>>, %arg6: memref<256x128xbf16, #tpu.memory_space<vmem>>, %arg7: memref<1x128xf32, #tpu.memory_space<vmem>>, %arg8: memref<128x4xbf16, #tpu.memory_space<vmem>>, %arg9: memref<1x4xf32, #tpu.memory_space<vmem>>, %arg10: memref<8x4xf32, #tpu.memory_space<vmem>>) attributes {dimension_semantics = [#tpu.dimension_semantics<parallel>], iteration_bounds = array<i64: 1>, scalar_prefetch = 0 : i64, scratch_operands = 0 : i64, tpu.core_type = #tpu.core_type<tc>, window_params = [{transform_indices = @transform_0, window_bounds = array<i64: 8, 2944>}, {pipeline_mode = #tpu.pipeline_mode<synchronous>, transform_indices = @transform_1, window_bounds = array<i64: 2944, 256>}, {pipeline_mode = #tpu.pipeline_mode<synchronous>, transform_indices = @transform_2, window_bounds = array<i64: 1, 256>}, {pipeline_mode = #tpu.pipeline_mode<synchronous>, transform_indices = @transform_3, window_bounds = array<i64: 256, 256>}, {pipeline_mode = #tpu.pipeline_mode<synchronous>, transform_indices = @transform_4, window_bounds = array<i64: 1, 256>}, {pipeline_mode = #tpu.pipeline_mode<synchronous>, transform_indices = @transform_5, window_bounds = array<i64: 256, 128>}, {pipeline_mode = #tpu.pipeline_mode<synchronous>, transform_indices = @transform_6, window_bounds = array<i64: 1, 128>}, {pipeline_mode = #tpu.pipeline_mode<synchronous>, transform_indices = @transform_7, window_bounds = array<i64: 128, 4>}, {pipeline_mode = #tpu.pipeline_mode<synchronous>, transform_indices = @transform_8, window_bounds = array<i64: 1, 4>}, {transform_indices = @transform_9, window_bounds = array<i64: 8, 4>}]} {
    %c0 = arith.constant 0 : index
    %c0_0 = arith.constant 0 : index
    %0 = vector.load %arg1[%c0, %c0_0] : memref<8x2944xbf16, #tpu.memory_space<vmem>>, vector<8x2944xbf16>
    %c0_1 = arith.constant 0 : index
    %c0_2 = arith.constant 0 : index
    %1 = vector.load %arg2[%c0_1, %c0_2] : memref<2944x256xbf16, #tpu.memory_space<vmem>>, vector<2944x256xbf16>
    %cst = arith.constant dense<0.000000e+00> : vector<8x256xf32>
    %2 = tpu.matmul %0, %1, %cst {dimension_numbers = #tpu.dot_dimension_numbers<[1], [0], [0], [1], [0, 0, 1, 1], [], []>} : vector<8x2944xbf16>, vector<2944x256xbf16>, vector<8x256xf32> -> vector<8x256xf32>
    %c0_3 = arith.constant 0 : index
    %c0_4 = arith.constant 0 : index
    %3 = vector.load %arg3[%c0_3, %c0_4] : memref<1x256xf32, #tpu.memory_space<vmem>>, vector<1x256xf32>
    %4 = vector.broadcast %3 : vector<1x256xf32> to vector<8x256xf32>
    %5 = arith.addf %2, %4 : vector<8x256xf32>
    %cst_5 = arith.constant 0.000000e+00 : f32
    %6 = vector.broadcast %cst_5 : f32 to vector<8x256xf32>
    %7 = arith.maximumf %5, %6 : vector<8x256xf32>
    %8 = arith.truncf %7 : vector<8x256xf32> to vector<8x256xbf16>
    %c0_6 = arith.constant 0 : index
    %c0_7 = arith.constant 0 : index
    %9 = vector.load %arg4[%c0_6, %c0_7] : memref<256x256xbf16, #tpu.memory_space<vmem>>, vector<256x256xbf16>
    %cst_8 = arith.constant dense<0.000000e+00> : vector<8x256xf32>
    %10 = tpu.matmul %8, %9, %cst_8 {dimension_numbers = #tpu.dot_dimension_numbers<[1], [0], [0], [1], [0, 0, 1, 1], [], []>} : vector<8x256xbf16>, vector<256x256xbf16>, vector<8x256xf32> -> vector<8x256xf32>
    %c0_9 = arith.constant 0 : index
    %c0_10 = arith.constant 0 : index
    %11 = vector.load %arg5[%c0_9, %c0_10] : memref<1x256xf32, #tpu.memory_space<vmem>>, vector<1x256xf32>
    %12 = vector.broadcast %11 : vector<1x256xf32> to vector<8x256xf32>
    %13 = arith.addf %10, %12 : vector<8x256xf32>
    %cst_11 = arith.constant 0.000000e+00 : f32
    %14 = vector.broadcast %cst_11 : f32 to vector<8x256xf32>
    %15 = arith.maximumf %13, %14 : vector<8x256xf32>
    %16 = arith.truncf %15 : vector<8x256xf32> to vector<8x256xbf16>
    %c0_12 = arith.constant 0 : index
    %c0_13 = arith.constant 0 : index
    %17 = vector.load %arg6[%c0_12, %c0_13] : memref<256x128xbf16, #tpu.memory_space<vmem>>, vector<256x128xbf16>
    %cst_14 = arith.constant dense<0.000000e+00> : vector<8x128xf32>
    %18 = tpu.matmul %16, %17, %cst_14 {dimension_numbers = #tpu.dot_dimension_numbers<[1], [0], [0], [1], [0, 0, 1, 1], [], []>} : vector<8x256xbf16>, vector<256x128xbf16>, vector<8x128xf32> -> vector<8x128xf32>
    %c0_15 = arith.constant 0 : index
    %c0_16 = arith.constant 0 : index
    %19 = vector.load %arg7[%c0_15, %c0_16] : memref<1x128xf32, #tpu.memory_space<vmem>>, vector<1x128xf32>
    %20 = vector.broadcast %19 : vector<1x128xf32> to vector<8x128xf32>
    %21 = arith.addf %18, %20 : vector<8x128xf32>
    %cst_17 = arith.constant 0.000000e+00 : f32
    %22 = vector.broadcast %cst_17 : f32 to vector<8x128xf32>
    %23 = arith.maximumf %21, %22 : vector<8x128xf32>
    %24 = arith.truncf %23 : vector<8x128xf32> to vector<8x128xbf16>
    %c0_18 = arith.constant 0 : index
    %c0_19 = arith.constant 0 : index
    %25 = vector.load %arg8[%c0_18, %c0_19] : memref<128x4xbf16, #tpu.memory_space<vmem>>, vector<128x4xbf16>
    %cst_20 = arith.constant dense<0.000000e+00> : vector<8x4xf32>
    %26 = tpu.matmul %24, %25, %cst_20 {dimension_numbers = #tpu.dot_dimension_numbers<[1], [0], [0], [1], [0, 0, 1, 1], [], []>} : vector<8x128xbf16>, vector<128x4xbf16>, vector<8x4xf32> -> vector<8x4xf32>
    %c0_21 = arith.constant 0 : index
    %c0_22 = arith.constant 0 : index
    %27 = vector.load %arg9[%c0_21, %c0_22] : memref<1x4xf32, #tpu.memory_space<vmem>>, vector<1x4xf32>
    %28 = vector.broadcast %27 : vector<1x4xf32> to vector<8x4xf32>
    %29 = arith.addf %26, %28 : vector<8x4xf32>
    %c0_23 = arith.constant 0 : index
    %c0_24 = arith.constant 0 : index
    %30 = vector.load %arg10[%c0_23, %c0_24] : memref<8x4xf32, #tpu.memory_space<vmem>>, vector<8x4xf32>
    tpu.vector_store %arg10[%c0_23, %c0_24], %29 {strides = array<i32>} : memref<8x4xf32, #tpu.memory_space<vmem>>, vector<8x4xf32>,
    return
  }
  func.func @transform_0(%arg0: i32) -> (i32, i32) {
    %c0_i32 = arith.constant 0 : i32
    %c0_i32_0 = arith.constant 0 : i32
    return %arg0, %c0_i32 : i32, i32
  }
  func.func @transform_1(%arg0: i32) -> (i32, i32) {
    %c0_i32 = arith.constant 0 : i32
    %c0_i32_0 = arith.constant 0 : i32
    %c0_i32_1 = arith.constant 0 : i32
    return %c0_i32, %c0_i32_0 : i32, i32
  }
  func.func @transform_2(%arg0: i32) -> (i32, i32) {
    %c0_i32 = arith.constant 0 : i32
    %c0_i32_0 = arith.constant 0 : i32
    %c0_i32_1 = arith.constant 0 : i32
    return %c0_i32, %c0_i32_0 : i32, i32
  }
  func.func @transform_3(%arg0: i32) -> (i32, i32) {
    %c0_i32 = arith.constant 0 : i32
    %c0_i32_0 = arith.constant 0 : i32
    %c0_i32_1 = arith.constant 0 : i32
    return %c0_i32, %c0_i32_0 : i32, i32
  }
  func.func @transform_4(%arg0: i32) -> (i32, i32) {
    %c0_i32 = arith.constant 0 : i32
    %c0_i32_0 = arith.constant 0 : i32
    %c0_i32_1 = arith.constant 0 : i32
    return %c0_i32, %c0_i32_0 : i32, i32
  }
  func.func @transform_5(%arg0: i32) -> (i32, i32) {
    %c0_i32 = arith.constant 0 : i32
    %c0_i32_0 = arith.constant 0 : i32
    %c0_i32_1 = arith.constant 0 : i32
    return %c0_i32, %c0_i32_0 : i32, i32
  }
  func.func @transform_6(%arg0: i32) -> (i32, i32) {
    %c0_i32 = arith.constant 0 : i32
    %c0_i32_0 = arith.constant 0 : i32
    %c0_i32_1 = arith.constant 0 : i32
    return %c0_i32, %c0_i32_0 : i32, i32
  }
  func.func @transform_7(%arg0: i32) -> (i32, i32) {
    %c0_i32 = arith.constant 0 : i32
    %c0_i32_0 = arith.constant 0 : i32
    %c0_i32_1 = arith.constant 0 : i32
    return %c0_i32, %c0_i32_0 : i32, i32
  }
  func.func @transform_8(%arg0: i32) -> (i32, i32) {
    %c0_i32 = arith.constant 0 : i32
    %c0_i32_0 = arith.constant 0 : i32
    %c0_i32_1 = arith.constant 0 : i32
    return %c0_i32, %c0_i32_0 : i32, i32
  }
  func.func @transform_9(%arg0: i32) -> (i32, i32) {
    %c0_i32 = arith.constant 0 : i32
    %c0_i32_0 = arith.constant 0 : i32
    return %arg0, %c0_i32 : i32, i32
  }
}

</mosaic_0001>

<llo_original>
// kernel: neural_net_forward.1
$region0: #{neural_net_forward.1}
  #allocation0 [shape = 'u32[]', space=smem, size = 0x4, offset = 0x4, fixed_abs, tag = 'smem constant byte address 0x4 - core index']
  #allocation1 [shape = 'u32[144,128]{1,0:T(1,128)}', space=vmem, size = 0x12000, scoped, tag = 'internal scratch']
  %s0 = inlined_call_operand.vmem [shape: bf16[8,2944], index: 0, kind: input, shape index: {}]
  %s1 = inlined_call_operand.hbm [shape: bf16[2944,256], index: 1, kind: input, shape index: {}]
  %s2 = inlined_call_operand.hbm [shape: f32[1,256], index: 2, kind: input, shape index: {}]
  %s3 = inlined_call_operand.hbm [shape: bf16[256,256], index: 3, kind: input, shape index: {}]
  %s4 = inlined_call_operand.hbm [shape: f32[1,256], index: 4, kind: input, shape index: {}]
  %s5 = inlined_call_operand.hbm [shape: bf16[256,128], index: 5, kind: input, shape index: {}]
  %s6 = inlined_call_operand.hbm [shape: f32[1,128], index: 6, kind: input, shape index: {}]
  %s7 = inlined_call_operand.vmem [shape: bf16[128,4], index: 7, kind: input, shape index: {}]
  %s8 = inlined_call_operand.hbm [shape: f32[1,4], index: 8, kind: input, shape index: {}]
  %s9 = inlined_call_operand.vmem [shape: f32[8,4], index: 9, kind: output, shape index: {}]
  %s10 = sld [smem:[#allocation0]]
  $region74: #{neural_net_forward.1} parent=0
    _
  %s12 = ssub.s32 1, %s10
  %s13 = scalar_select 0, %s12, %s10
  $region1: #{neural_net_forward.1} parent=0
    #allocation2 [shape = 'u8[1507328]{0}', space=vmem, size = 0x170000, scoped, tag = 'input window, operand 1, single buffered']
    #allocation3 [shape = 's32[1]{0}', space=sflag, size = 0x4, scoped, tag = 'scoped memory for neural_net_forward.1']
    #allocation4 [shape = 'u8[1024]{0}', space=vmem, size = 0x400, scoped, tag = 'input window, operand 2, single buffered']
    #allocation5 [shape = 's32[1]{0}', space=sflag, size = 0x4, scoped, tag = 'scoped memory for neural_net_forward.1']
    #allocation6 [shape = 'u8[131072]{0}', space=vmem, size = 0x20000, scoped, tag = 'input window, operand 3, single buffered']
    #allocation7 [shape = 'u8[1024]{0}', space=vmem, size = 0x400, scoped, tag = 'input window, operand 4, single buffered']
    #allocation8 [shape = 's32[1]{0}', space=sflag, size = 0x4, scoped, tag = 'scoped memory for neural_net_forward.1']
    #allocation9 [shape = 'u8[65536]{0}', space=vmem, size = 0x10000, scoped, tag = 'input window, operand 5, single buffered']
    #allocation10 [shape = 'u8[512]{0}', space=vmem, size = 0x400, scoped, tag = 'input window, operand 6, single buffered']
    #allocation11 [shape = 's32[1]{0}', space=sflag, size = 0x4, scoped, tag = 'scoped memory for neural_net_forward.1']
    #allocation12 [shape = 'u8[512]{0}', space=vmem, size = 0x400, scoped, tag = 'input window, operand 8, single buffered']
    %14 = vsyncpa [#allocation3], 0
    %15 = vsyncpa [#allocation5], 0
    %16 = vsyncpa [#allocation8], 0
    %17 = vsyncpa [#allocation11], 0
    // Predicated region
    $region2: #{neural_net_forward.1} parent=1 // pred_check
      _
    $region3: #{neural_net_forward.1} parent=1 // pred_check_branch
      %19 = sbr.rel (0) target = $region5
    $region4: #{neural_net_forward.1} parent=1 // pred_region
      _
    $region5: #{neural_net_forward.1} parent=1 // pred_fallthru
      _
    // Predicated region
    $region6: #{neural_net_forward.1} parent=1 // pred_check
      _
    $region7: #{neural_net_forward.1} parent=1 // pred_check_branch
      %21 = sbr.rel (0) target = $region9
    $region8: #{neural_net_forward.1} parent=1 // pred_region
      %s23 = ssub.s32 47104, 47104
      %24 = vsyncadd [#allocation3], %s23
      %s25 = sshll.u32 [#allocation2], 4
      %s26 = int_to_ptr.vmem [resolvable:$true] %s25
      %31 = dma.hbm_to_vmem [thread:$0]  %s1, 47104, %s26, [#allocation3], 128, 128, 8
    $region9: #{neural_net_forward.1} parent=1 // pred_fallthru
      _
    // Predicated region
    $region10: #{neural_net_forward.1} parent=1 // pred_check
      _
    $region11: #{neural_net_forward.1} parent=1 // pred_check_branch
      %33 = sbr.rel (0) target = $region13
    $region12: #{neural_net_forward.1} parent=1 // pred_region
      %s35 = ssub.s32 32, 32
      %36 = vsyncadd [#allocation5], %s35
      %s38 = sshll.u32 [#allocation4], 4
      %s39 = int_to_ptr.vmem [resolvable:$true] %s38
      %41 = dma.hbm_to_vmem [thread:$0]  %s2, 32, %s39, [#allocation5]
    $region13: #{neural_net_forward.1} parent=1 // pred_fallthru
      _
    // Predicated region
    $region14: #{neural_net_forward.1} parent=1 // pred_check
      _
    $region15: #{neural_net_forward.1} parent=1 // pred_check_branch
      %43 = sbr.rel (0) target = $region17
    $region16: #{neural_net_forward.1} parent=1 // pred_region
      %s45 = ssub.s32 4096, 4096
      %46 = vsyncadd [#allocation5], %s45
      %s47 = sshll.u32 [#allocation6], 4
      %s48 = int_to_ptr.vmem [resolvable:$true] %s47
      %53 = dma.hbm_to_vmem [thread:$0]  %s3, 4096, %s48, [#allocation5], 128, 128, 8
    $region17: #{neural_net_forward.1} parent=1 // pred_fallthru
      _
    // Predicated region
    $region18: #{neural_net_forward.1} parent=1 // pred_check
      _
    $region19: #{neural_net_forward.1} parent=1 // pred_check_branch
      %55 = sbr.rel (0) target = $region21
    $region20: #{neural_net_forward.1} parent=1 // pred_region
      %s57 = ssub.s32 32, 32
      %58 = vsyncadd [#allocation8], %s57
      %s60 = sshll.u32 [#allocation7], 4
      %s61 = int_to_ptr.vmem [resolvable:$true] %s60
      %63 = dma.hbm_to_vmem [thread:$0]  %s4, 32, %s61, [#allocation8]
    $region21: #{neural_net_forward.1} parent=1 // pred_fallthru
      _
    // Predicated region
    $region22: #{neural_net_forward.1} parent=1 // pred_check
      _
    $region23: #{neural_net_forward.1} parent=1 // pred_check_branch
      %65 = sbr.rel (0) target = $region25
    $region24: #{neural_net_forward.1} parent=1 // pred_region
      %s67 = ssub.s32 2048, 2048
      %68 = vsyncadd [#allocation8], %s67
      %s69 = sshll.u32 [#allocation9], 4
      %s70 = int_to_ptr.vmem [resolvable:$true] %s69
      %75 = dma.hbm_to_vmem [thread:$0]  %s5, 2048, %s70, [#allocation8], 64, 64, 4
    $region25: #{neural_net_forward.1} parent=1 // pred_fallthru
      _
    // Predicated region
    $region26: #{neural_net_forward.1} parent=1 // pred_check
      _
    $region27: #{neural_net_forward.1} parent=1 // pred_check_branch
      %77 = sbr.rel (0) target = $region29
    $region28: #{neural_net_forward.1} parent=1 // pred_region
      %s79 = ssub.s32 16, 16
      %80 = vsyncadd [#allocation11], %s79
      %s82 = sshll.u32 [#allocation10], 4
      %s83 = int_to_ptr.vmem [resolvable:$true] %s82
      %85 = dma.hbm_to_vmem [thread:$0]  %s6, 16, %s83, [#allocation11]
    $region29: #{neural_net_forward.1} parent=1 // pred_fallthru
      _
    // Predicated region
    $region30: #{neural_net_forward.1} parent=1 // pred_check
      _
    $region31: #{neural_net_forward.1} parent=1 // pred_check_branch
      %87 = sbr.rel (0) target = $region33
    $region32: #{neural_net_forward.1} parent=1 // pred_region
      _
    $region33: #{neural_net_forward.1} parent=1 // pred_fallthru
      _
    // Predicated region
    $region34: #{neural_net_forward.1} parent=1 // pred_check
      _
    $region35: #{neural_net_forward.1} parent=1 // pred_check_branch
      %89 = sbr.rel (0) target = $region37
    $region36: #{neural_net_forward.1} parent=1 // pred_region
      %s91 = ssub.s32 16, 16
      %92 = vsyncadd [#allocation11], %s91
      %s94 = sshll.u32 [#allocation12], 4
      %s95 = int_to_ptr.vmem [resolvable:$true] %s94
      %97 = dma.hbm_to_vmem [thread:$0]  %s8, 16, %s95, [#allocation11]
    $region37: #{neural_net_forward.1} parent=1 // pred_fallthru
      _
    // Predicated region
    $region38: #{neural_net_forward.1} parent=1 // pred_check
      _
    $region39: #{neural_net_forward.1} parent=1 // pred_check_branch
      %99 = sbr.rel (0) target = $region41
    $region40: #{neural_net_forward.1} parent=1 // pred_region
      %100 = dma.done [#allocation3], 47104
    $region41: #{neural_net_forward.1} parent=1 // pred_fallthru
      _
    // Predicated region
    $region42: #{neural_net_forward.1} parent=1 // pred_check
      _
    $region43: #{neural_net_forward.1} parent=1 // pred_check_branch
      %102 = sbr.rel (0) target = $region45
    $region44: #{neural_net_forward.1} parent=1 // pred_region
      %103 = dma.done [#allocation5], 32
    $region45: #{neural_net_forward.1} parent=1 // pred_fallthru
      _
    // Predicated region
    $region46: #{neural_net_forward.1} parent=1 // pred_check
      _
    $region47: #{neural_net_forward.1} parent=1 // pred_check_branch
      %105 = sbr.rel (0) target = $region49
    $region48: #{neural_net_forward.1} parent=1 // pred_region
      %106 = dma.done [#allocation5], 4096
    $region49: #{neural_net_forward.1} parent=1 // pred_fallthru
      _
    // Predicated region
    $region50: #{neural_net_forward.1} parent=1 // pred_check
      _
    $region51: #{neural_net_forward.1} parent=1 // pred_check_branch
      %108 = sbr.rel (0) target = $region53
    $region52: #{neural_net_forward.1} parent=1 // pred_region
      %109 = dma.done [#allocation8], 32
    $region53: #{neural_net_forward.1} parent=1 // pred_fallthru
      _
    // Predicated region
    $region54: #{neural_net_forward.1} parent=1 // pred_check
      _
    $region55: #{neural_net_forward.1} parent=1 // pred_check_branch
      %111 = sbr.rel (0) target = $region57
    $region56: #{neural_net_forward.1} parent=1 // pred_region
      %112 = dma.done [#allocation8], 2048
    $region57: #{neural_net_forward.1} parent=1 // pred_fallthru
      _
    // Predicated region
    $region58: #{neural_net_forward.1} parent=1 // pred_check
      _
    $region59: #{neural_net_forward.1} parent=1 // pred_check_branch
      %114 = sbr.rel (0) target = $region61
    $region60: #{neural_net_forward.1} parent=1 // pred_region
      %115 = dma.done [#allocation11], 16
    $region61: #{neural_net_forward.1} parent=1 // pred_fallthru
      _
    // Predicated region
    $region62: #{neural_net_forward.1} parent=1 // pred_check
      _
    $region63: #{neural_net_forward.1} parent=1 // pred_check_branch
      %117 = sbr.rel (0) target = $region65
    $region64: #{neural_net_forward.1} parent=1 // pred_region
      %118 = dma.done [#allocation11], 16
    $region65: #{neural_net_forward.1} parent=1 // pred_fallthru
      _
    %v120 = vld [vmem:[%s0] sm:$0xff]
    %v121 = vld [vmem:[%s0 + $0x8] sm:$0xff]
    %v122 = vld [vmem:[%s0 + $0x10] sm:$0xff]
    %v123 = vld [vmem:[%s0 + $0x18] sm:$0xff]
    %v124 = vld [vmem:[%s0 + $0x20] sm:$0xff]
    %v125 = vld [vmem:[%s0 + $0x28] sm:$0xff]
    %v126 = vld [vmem:[%s0 + $0x30] sm:$0xff]
    %v127 = vld [vmem:[%s0 + $0x38] sm:$0xff]
    %v128 = vld [vmem:[%s0 + $0x40] sm:$0xff]
    %v129 = vld [vmem:[%s0 + $0x48] sm:$0xff]
    %v130 = vld [vmem:[%s0 + $0x50] sm:$0xff]
    %v131 = vld [vmem:[%s0 + $0x58] sm:$0xf]
    %v132 = vld [vmem:[#allocation2] sm:$0xff]
    %v133 = vld [vmem:[#allocation2 + $0x8] sm:$0xff]
    %v134 = vld [vmem:[#allocation2 + $0x10] sm:$0xff]
    %v135 = vld [vmem:[#allocation2 + $0x18] sm:$0xff]
    %v136 = vld [vmem:[#allocation2 + $0x20] sm:$0xff]
    %v137 = vld [vmem:[#allocation2 + $0x28] sm:$0xff]
    %v138 = vld [vmem:[#allocation2 + $0x30] sm:$0xff]
    %v139 = vld [vmem:[#allocation2 + $0x38] sm:$0xff]
    %v140 = vld [vmem:[#allocation2 + $0x40] sm:$0xff]
    %v141 = vld [vmem:[#allocation2 + $0x48] sm:$0xff]
    %v142 = vld [vmem:[#allocation2 + $0x50] sm:$0xff]
    %v143 = vld [vmem:[#allocation2 + $0x58] sm:$0xff]
    %v144 = vld [vmem:[#allocation2 + $0x60] sm:$0xff]
    %v145 = vld [vmem:[#allocation2 + $0x68] sm:$0xff]
    %v146 = vld [vmem:[#allocation2 + $0x70] sm:$0xff]
    %v147 = vld [vmem:[#allocation2 + $0x78] sm:$0xff]
    %v148 = vld [vmem:[#allocation2 + $0x80] sm:$0xff]
    %v149 = vld [vmem:[#allocation2 + $0x88] sm:$0xff]
    %v150 = vld [vmem:[#allocation2 + $0x90] sm:$0xff]
    %v151 = vld [vmem:[#allocation2 + $0x98] sm:$0xff]
    %v152 = vld [vmem:[#allocation2 + $0xa0] sm:$0xff]
    %v153 = vld [vmem:[#allocation2 + $0xa8] sm:$0xff]
    %v154 = vld [vmem:[#allocation2 + $0xb0] sm:$0xff]
    %v155 = vld [vmem:[#allocation2 + $0xb8] sm:$0xff]
    %v156 = vld [vmem:[#allocation2 + $0xc0] sm:$0xff]
    %v157 = vld [vmem:[#allocation2 + $0xc8] sm:$0xff]
    %v158 = vld [vmem:[#allocation2 + $0xd0] sm:$0xff]
    %v159 = vld [vmem:[#allocation2 + $0xd8] sm:$0xff]
    %v160 = vld [vmem:[#allocation2 + $0xe0] sm:$0xff]
    %v161 = vld [vmem:[#allocation2 + $0xe8] sm:$0xff]
    %v162 = vld [vmem:[#allocation2 + $0xf0] sm:$0xff]
    %v163 = vld [vmem:[#allocation2 + $0xf8] sm:$0xff]
    %v164 = vld [vmem:[#allocation2 + $0x100] sm:$0xff]
    %v165 = vld [vmem:[#allocation2 + $0x108] sm:$0xff]
    %v166 = vld [vmem:[#allocation2 + $0x110] sm:$0xff]
    %v167 = vld [vmem:[#allocation2 + $0x118] sm:$0xff]
    %v168 = vld [vmem:[#allocation2 + $0x120] sm:$0xff]
    %v169 = vld [vmem:[#allocation2 + $0x128] sm:$0xff]
    %v170 = vld [vmem:[#allocation2 + $0x130] sm:$0xff]
    %v171 = vld [vmem:[#allocation2 + $0x138] sm:$0xff]
    %v172 = vld [vmem:[#allocation2 + $0x140] sm:$0xff]
    %v173 = vld [vmem:[#allocation2 + $0x148] sm:$0xff]
    %v174 = vld [vmem:[#allocation2 + $0x150] sm:$0xff]
    %v175 = vld [vmem:[#allocation2 + $0x158] sm:$0xff]
    %v176 = vld [vmem:[#allocation2 + $0x160] sm:$0xff]
    %v177 = vld [vmem:[#allocation2 + $0x168] sm:$0xff]
    %v178 = vld [vmem:[#allocation2 + $0x170] sm:$0xff]
    %v179 = vld [vmem:[#allocation2 + $0x178] sm:$0xff]
    %v180 = vld [vmem:[#allocation2 + $0x180] sm:$0xff]
    %v181 = vld [vmem:[#allocation2 + $0x188] sm:$0xff]
    %v182 = vld [vmem:[#allocation2 + $0x190] sm:$0xff]
    %v183 = vld [vmem:[#allocation2 + $0x198] sm:$0xff]
    %v184 = vld [vmem:[#allocation2 + $0x1a0] sm:$0xff]
    %v185 = vld [vmem:[#allocation2 + $0x1a8] sm:$0xff]
    %v186 = vld [vmem:[#allocation2 + $0x1b0] sm:$0xff]
    %v187 = vld [vmem:[#allocation2 + $0x1b8] sm:$0xff]
    %v188 = vld [vmem:[#allocation2 + $0x1c0] sm:$0xff]
    %v189 = vld [vmem:[#allocation2 + $0x1c8] sm:$0xff]
    %v190 = vld [vmem:[#allocation2 + $0x1d0] sm:$0xff]
    %v191 = vld [vmem:[#allocation2 + $0x1d8] sm:$0xff]
    %v192 = vld [vmem:[#allocation2 + $0x1e0] sm:$0xff]
    %v193 = vld [vmem:[#allocation2 + $0x1e8] sm:$0xff]
    %v194 = vld [vmem:[#allocation2 + $0x1f0] sm:$0xff]
    %v195 = vld [vmem:[#allocation2 + $0x1f8] sm:$0xff]
    %v196 = vld [vmem:[#allocation2 + $0x200] sm:$0xff]
    %v197 = vld [vmem:[#allocation2 + $0x208] sm:$0xff]
    %v198 = vld [vmem:[#allocation2 + $0x210] sm:$0xff]
    %v199 = vld [vmem:[#allocation2 + $0x218] sm:$0xff]
    %v200 = vld [vmem:[#allocation2 + $0x220] sm:$0xff]
    %v201 = vld [vmem:[#allocation2 + $0x228] sm:$0xff]
    %v202 = vld [vmem:[#allocation2 + $0x230] sm:$0xff]
    %v203 = vld [vmem:[#allocation2 + $0x238] sm:$0xff]
    %v204 = vld [vmem:[#allocation2 + $0x240] sm:$0xff]
    %v205 = vld [vmem:[#allocation2 + $0x248] sm:$0xff]
    %v206 = vld [vmem:[#allocation2 + $0x250] sm:$0xff]
    %v207 = vld [vmem:[#allocation2 + $0x258] sm:$0xff]
    %v208 = vld [vmem:[#allocation2 + $0x260] sm:$0xff]
    %v209 = vld [vmem:[#allocation2 + $0x268] sm:$0xff]
    %v210 = vld [vmem:[#allocation2 + $0x270] sm:$0xff]
    %v211 = vld [vmem:[#allocation2 + $0x278] sm:$0xff]
    %v212 = vld [vmem:[#allocation2 + $0x280] sm:$0xff]
    %v213 = vld [vmem:[#allocation2 + $0x288] sm:$0xff]
    %v214 = vld [vmem:[#allocation2 + $0x290] sm:$0xff]
    %v215 = vld [vmem:[#allocation2 + $0x298] sm:$0xff]
    %v216 = vld [vmem:[#allocation2 + $0x2a0] sm:$0xff]
    %v217 = vld [vmem:[#allocation2 + $0x2a8] sm:$0xff]
    %v218 = vld [vmem:[#allocation2 + $0x2b0] sm:$0xff]
    %v219 = vld [vmem:[#allocation2 + $0x2b8] sm:$0xff]
    %v220 = vld [vmem:[#allocation2 + $0x2c0] sm:$0xff]
    %v221 = vld [vmem:[#allocation2 + $0x2c8] sm:$0xff]
    %v222 = vld [vmem:[#allocation2 + $0x2d0] sm:$0xff]
    %v223 = vld [vmem:[#allocation2 + $0x2d8] sm:$0xff]
    %v224 = vld [vmem:[#allocation2 + $0x2e0] sm:$0xff]
    %v225 = vld [vmem:[#allocation2 + $0x2e8] sm:$0xff]
    %v226 = vld [vmem:[#allocation2 + $0x2f0] sm:$0xff]
    %v227 = vld [vmem:[#allocation2 + $0x2f8] sm:$0xff]
    %v228 = vld [vmem:[#allocation2 + $0x300] sm:$0xff]
    %v229 = vld [vmem:[#allocation2 + $0x308] sm:$0xff]
    %v230 = vld [vmem:[#allocation2 + $0x310] sm:$0xff]
    %v231 = vld [vmem:[#allocation2 + $0x318] sm:$0xff]
    %v232 = vld [vmem:[#allocation2 + $0x320] sm:$0xff]
    %v233 = vld [vmem:[#allocation2 + $0x328] sm:$0xff]
    %v234 = vld [vmem:[#allocation2 + $0x330] sm:$0xff]
    %v235 = vld [vmem:[#allocation2 + $0x338] sm:$0xff]
    %v236 = vld [vmem:[#allocation2 + $0x340] sm:$0xff]
    %v237 = vld [vmem:[#allocation2 + $0x348] sm:$0xff]
    %v238 = vld [vmem:[#allocation2 + $0x350] sm:$0xff]
    %v239 = vld [vmem:[#allocation2 + $0x358] sm:$0xff]
    %v240 = vld [vmem:[#allocation2 + $0x360] sm:$0xff]
    %v241 = vld [vmem:[#allocation2 + $0x368] sm:$0xff]
    %v242 = vld [vmem:[#allocation2 + $0x370] sm:$0xff]
    %v243 = vld [vmem:[#allocation2 + $0x378] sm:$0xff]
    %v244 = vld [vmem:[#allocation2 + $0x380] sm:$0xff]
    %v245 = vld [vmem:[#allocation2 + $0x388] sm:$0xff]
    %v246 = vld [vmem:[#allocation2 + $0x390] sm:$0xff]
    %v247 = vld [vmem:[#allocation2 + $0x398] sm:$0xff]
    %v248 = vld [vmem:[#allocation2 + $0x3a0] sm:$0xff]
    %v249 = vld [vmem:[#allocation2 + $0x3a8] sm:$0xff]
    %v250 = vld [vmem:[#allocation2 + $0x3b0] sm:$0xff]
    %v251 = vld [vmem:[#allocation2 + $0x3b8] sm:$0xff]
    %v252 = vld [vmem:[#allocation2 + $0x3c0] sm:$0xff]
    %v253 = vld [vmem:[#allocation2 + $0x3c8] sm:$0xff]
    %v254 = vld [vmem:[#allocation2 + $0x3d0] sm:$0xff]
    %v255 = vld [vmem:[#allocation2 + $0x3d8] sm:$0xff]
    %v256 = vld [vmem:[#allocation2 + $0x3e0] sm:$0xff]
    %v257 = vld [vmem:[#allocation2 + $0x3e8] sm:$0xff]
    %v258 = vld [vmem:[#allocation2 + $0x3f0] sm:$0xff]
    %v259 = vld [vmem:[#allocation2 + $0x3f8] sm:$0xff]
    %v260 = vld [vmem:[#allocation2 + $0x400] sm:$0xff]
    %v261 = vld [vmem:[#allocation2 + $0x408] sm:$0xff]
    %v262 = vld [vmem:[#allocation2 + $0x410] sm:$0xff]
    %v263 = vld [vmem:[#allocation2 + $0x418] sm:$0xff]
    %v264 = vld [vmem:[#allocation2 + $0x420] sm:$0xff]
    %v265 = vld [vmem:[#allocation2 + $0x428] sm:$0xff]
    %v266 = vld [vmem:[#allocation2 + $0x430] sm:$0xff]
    %v267 = vld [vmem:[#allocation2 + $0x438] sm:$0xff]
    %v268 = vld [vmem:[#allocation2 + $0x440] sm:$0xff]
    %v269 = vld [vmem:[#allocation2 + $0x448] sm:$0xff]
    %v270 = vld [vmem:[#allocation2 + $0x450] sm:$0xff]
    %v271 = vld [vmem:[#allocation2 + $0x458] sm:$0xff]
    %v272 = vld [vmem:[#allocation2 + $0x460] sm:$0xff]
    %v273 = vld [vmem:[#allocation2 + $0x468] sm:$0xff]
    %v274 = vld [vmem:[#allocation2 + $0x470] sm:$0xff]
    %v275 = vld [vmem:[#allocation2 + $0x478] sm:$0xff]
    %v276 = vld [vmem:[#allocation2 + $0x480] sm:$0xff]
    %v277 = vld [vmem:[#allocation2 + $0x488] sm:$0xff]
    %v278 = vld [vmem:[#allocation2 + $0x490] sm:$0xff]
    %v279 = vld [vmem:[#allocation2 + $0x498] sm:$0xff]
    %v280 = vld [vmem:[#allocation2 + $0x4a0] sm:$0xff]
    %v281 = vld [vmem:[#allocation2 + $0x4a8] sm:$0xff]
    %v282 = vld [vmem:[#allocation2 + $0x4b0] sm:$0xff]
    %v283 = vld [vmem:[#allocation2 + $0x4b8] sm:$0xff]
    %v284 = vld [vmem:[#allocation2 + $0x4c0] sm:$0xff]
    %v285 = vld [vmem:[#allocation2 + $0x4c8] sm:$0xff]
    %v286 = vld [vmem:[#allocation2 + $0x4d0] sm:$0xff]
    %v287 = vld [vmem:[#allocation2 + $0x4d8] sm:$0xff]
    %v288 = vld [vmem:[#allocation2 + $0x4e0] sm:$0xff]
    %v289 = vld [vmem:[#allocation2 + $0x4e8] sm:$0xff]
    %v290 = vld [vmem:[#allocation2 + $0x4f0] sm:$0xff]
    %v291 = vld [vmem:[#allocation2 + $0x4f8] sm:$0xff]
    %v292 = vld [vmem:[#allocation2 + $0x500] sm:$0xff]
    %v293 = vld [vmem:[#allocation2 + $0x508] sm:$0xff]
    %v294 = vld [vmem:[#allocation2 + $0x510] sm:$0xff]
    %v295 = vld [vmem:[#allocation2 + $0x518] sm:$0xff]
    %v296 = vld [vmem:[#allocation2 + $0x520] sm:$0xff]
    %v297 = vld [vmem:[#allocation2 + $0x528] sm:$0xff]
    %v298 = vld [vmem:[#allocation2 + $0x530] sm:$0xff]
    %v299 = vld [vmem:[#allocation2 + $0x538] sm:$0xff]
    %v300 = vld [vmem:[#allocation2 + $0x540] sm:$0xff]
    %v301 = vld [vmem:[#allocation2 + $0x548] sm:$0xff]
    %v302 = vld [vmem:[#allocation2 + $0x550] sm:$0xff]
    %v303 = vld [vmem:[#allocation2 + $0x558] sm:$0xff]
    %v304 = vld [vmem:[#allocation2 + $0x560] sm:$0xff]
    %v305 = vld [vmem:[#allocation2 + $0x568] sm:$0xff]
    %v306 = vld [vmem:[#allocation2 + $0x570] sm:$0xff]
    %v307 = vld [vmem:[#allocation2 + $0x578] sm:$0xff]
    %v308 = vld [vmem:[#allocation2 + $0x580] sm:$0xff]
    %v309 = vld [vmem:[#allocation2 + $0x588] sm:$0xff]
    %v310 = vld [vmem:[#allocation2 + $0x590] sm:$0xff]
    %v311 = vld [vmem:[#allocation2 + $0x598] sm:$0xff]
    %v312 = vld [vmem:[#allocation2 + $0x5a0] sm:$0xff]
    %v313 = vld [vmem:[#allocation2 + $0x5a8] sm:$0xff]
    %v314 = vld [vmem:[#allocation2 + $0x5b0] sm:$0xff]
    %v315 = vld [vmem:[#allocation2 + $0x5b8] sm:$0xff]
    %v316 = vld [vmem:[#allocation2 + $0x5c0] sm:$0xff]
    %v317 = vld [vmem:[#allocation2 + $0x5c8] sm:$0xff]
    %v318 = vld [vmem:[#allocation2 + $0x5d0] sm:$0xff]
    %v319 = vld [vmem:[#allocation2 + $0x5d8] sm:$0xff]
    %v320 = vld [vmem:[#allocation2 + $0x5e0] sm:$0xff]
    %v321 = vld [vmem:[#allocation2 + $0x5e8] sm:$0xff]
    %v322 = vld [vmem:[#allocation2 + $0x5f0] sm:$0xff]
    %v323 = vld [vmem:[#allocation2 + $0x5f8] sm:$0xff]
    %v324 = vld [vmem:[#allocation2 + $0x600] sm:$0xff]
    %v325 = vld [vmem:[#allocation2 + $0x608] sm:$0xff]
    %v326 = vld [vmem:[#allocation2 + $0x610] sm:$0xff]
    %v327 = vld [vmem:[#allocation2 + $0x618] sm:$0xff]
    %v328 = vld [vmem:[#allocation2 + $0x620] sm:$0xff]
    %v329 = vld [vmem:[#allocation2 + $0x628] sm:$0xff]
    %v330 = vld [vmem:[#allocation2 + $0x630] sm:$0xff]
    %v331 = vld [vmem:[#allocation2 + $0x638] sm:$0xff]
    %v332 = vld [vmem:[#allocation2 + $0x640] sm:$0xff]
    %v333 = vld [vmem:[#allocation2 + $0x648] sm:$0xff]
    %v334 = vld [vmem:[#allocation2 + $0x650] sm:$0xff]
    %v335 = vld [vmem:[#allocation2 + $0x658] sm:$0xff]
    %v336 = vld [vmem:[#allocation2 + $0x660] sm:$0xff]
    %v337 = vld [vmem:[#allocation2 + $0x668] sm:$0xff]
    %v338 = vld [vmem:[#allocation2 + $0x670] sm:$0xff]
    %v339 = vld [vmem:[#allocation2 + $0x678] sm:$0xff]
    %v340 = vld [vmem:[#allocation2 + $0x680] sm:$0xff]
    %v341 = vld [vmem:[#allocation2 + $0x688] sm:$0xff]
    %v342 = vld [vmem:[#allocation2 + $0x690] sm:$0xff]
    %v343 = vld [vmem:[#allocation2 + $0x698] sm:$0xff]
    %v344 = vld [vmem:[#allocation2 + $0x6a0] sm:$0xff]
    %v345 = vld [vmem:[#allocation2 + $0x6a8] sm:$0xff]
    %v346 = vld [vmem:[#allocation2 + $0x6b0] sm:$0xff]
    %v347 = vld [vmem:[#allocation2 + $0x6b8] sm:$0xff]
    %v348 = vld [vmem:[#allocation2 + $0x6c0] sm:$0xff]
    %v349 = vld [vmem:[#allocation2 + $0x6c8] sm:$0xff]
    %v350 = vld [vmem:[#allocation2 + $0x6d0] sm:$0xff]
    %v351 = vld [vmem:[#allocation2 + $0x6d8] sm:$0xff]
    %v352 = vld [vmem:[#allocation2 + $0x6e0] sm:$0xff]
    %v353 = vld [vmem:[#allocation2 + $0x6e8] sm:$0xff]
    %v354 = vld [vmem:[#allocation2 + $0x6f0] sm:$0xff]
    %v355 = vld [vmem:[#allocation2 + $0x6f8] sm:$0xff]
    %v356 = vld [vmem:[#allocation2 + $0x700] sm:$0xff]
    %v357 = vld [vmem:[#allocation2 + $0x708] sm:$0xff]
    %v358 = vld [vmem:[#allocation2 + $0x710] sm:$0xff]
    %v359 = vld [vmem:[#allocation2 + $0x718] sm:$0xff]
    %v360 = vld [vmem:[#allocation2 + $0x720] sm:$0xff]
    %v361 = vld [vmem:[#allocation2 + $0x728] sm:$0xff]
    %v362 = vld [vmem:[#allocation2 + $0x730] sm:$0xff]
    %v363 = vld [vmem:[#allocation2 + $0x738] sm:$0xff]
    %v364 = vld [vmem:[#allocation2 + $0x740] sm:$0xff]
    %v365 = vld [vmem:[#allocation2 + $0x748] sm:$0xff]
    %v366 = vld [vmem:[#allocation2 + $0x750] sm:$0xff]
    %v367 = vld [vmem:[#allocation2 + $0x758] sm:$0xff]
    %v368 = vld [vmem:[#allocation2 + $0x760] sm:$0xff]
    %v369 = vld [vmem:[#allocation2 + $0x768] sm:$0xff]
    %v370 = vld [vmem:[#allocation2 + $0x770] sm:$0xff]
    %v371 = vld [vmem:[#allocation2 + $0x778] sm:$0xff]
    %v372 = vld [vmem:[#allocation2 + $0x780] sm:$0xff]
    %v373 = vld [vmem:[#allocation2 + $0x788] sm:$0xff]
    %v374 = vld [vmem:[#allocation2 + $0x790] sm:$0xff]
    %v375 = vld [vmem:[#allocation2 + $0x798] sm:$0xff]
    %v376 = vld [vmem:[#allocation2 + $0x7a0] sm:$0xff]
    %v377 = vld [vmem:[#allocation2 + $0x7a8] sm:$0xff]
    %v378 = vld [vmem:[#allocation2 + $0x7b0] sm:$0xff]
    %v379 = vld [vmem:[#allocation2 + $0x7b8] sm:$0xff]
    %v380 = vld [vmem:[#allocation2 + $0x7c0] sm:$0xff]
    %v381 = vld [vmem:[#allocation2 + $0x7c8] sm:$0xff]
    %v382 = vld [vmem:[#allocation2 + $0x7d0] sm:$0xff]
    %v383 = vld [vmem:[#allocation2 + $0x7d8] sm:$0xff]
    %v384 = vld [vmem:[#allocation2 + $0x7e0] sm:$0xff]
    %v385 = vld [vmem:[#allocation2 + $0x7e8] sm:$0xff]
    %v386 = vld [vmem:[#allocation2 + $0x7f0] sm:$0xff]
    %v387 = vld [vmem:[#allocation2 + $0x7f8] sm:$0xff]
    %v388 = vld [vmem:[#allocation2 + $0x800] sm:$0xff]
    %v389 = vld [vmem:[#allocation2 + $0x808] sm:$0xff]
    %v390 = vld [vmem:[#allocation2 + $0x810] sm:$0xff]
    %v391 = vld [vmem:[#allocation2 + $0x818] sm:$0xff]
    %v392 = vld [vmem:[#allocation2 + $0x820] sm:$0xff]
    %v393 = vld [vmem:[#allocation2 + $0x828] sm:$0xff]
    %v394 = vld [vmem:[#allocation2 + $0x830] sm:$0xff]
    %v395 = vld [vmem:[#allocation2 + $0x838] sm:$0xff]
    %v396 = vld [vmem:[#allocation2 + $0x840] sm:$0xff]
    %v397 = vld [vmem:[#allocation2 + $0x848] sm:$0xff]
    %v398 = vld [vmem:[#allocation2 + $0x850] sm:$0xff]
    %v399 = vld [vmem:[#allocation2 + $0x858] sm:$0xff]
    %v400 = vld [vmem:[#allocation2 + $0x860] sm:$0xff]
    %v401 = vld [vmem:[#allocation2 + $0x868] sm:$0xff]
    %v402 = vld [vmem:[#allocation2 + $0x870] sm:$0xff]
    %v403 = vld [vmem:[#allocation2 + $0x878] sm:$0xff]
    %v404 = vld [vmem:[#allocation2 + $0x880] sm:$0xff]
    %v405 = vld [vmem:[#allocation2 + $0x888] sm:$0xff]
    %v406 = vld [vmem:[#allocation2 + $0x890] sm:$0xff]
    %v407 = vld [vmem:[#allocation2 + $0x898] sm:$0xff]
    %v408 = vld [vmem:[#allocation2 + $0x8a0] sm:$0xff]
    %v409 = vld [vmem:[#allocation2 + $0x8a8] sm:$0xff]
    %v410 = vld [vmem:[#allocation2 + $0x8b0] sm:$0xff]
    %v411 = vld [vmem:[#allocation2 + $0x8b8] sm:$0xff]
    %v412 = vld [vmem:[#allocation2 + $0x8c0] sm:$0xff]
    %v413 = vld [vmem:[#allocation2 + $0x8c8] sm:$0xff]
    %v414 = vld [vmem:[#allocation2 + $0x8d0] sm:$0xff]
    %v415 = vld [vmem:[#allocation2 + $0x8d8] sm:$0xff]
    %v416 = vld [vmem:[#allocation2 + $0x8e0] sm:$0xff]
    %v417 = vld [vmem:[#allocation2 + $0x8e8] sm:$0xff]
    %v418 = vld [vmem:[#allocation2 + $0x8f0] sm:$0xff]
    %v419 = vld [vmem:[#allocation2 + $0x8f8] sm:$0xff]
    %v420 = vld [vmem:[#allocation2 + $0x900] sm:$0xff]
    %v421 = vld [vmem:[#allocation2 + $0x908] sm:$0xff]
    %v422 = vld [vmem:[#allocation2 + $0x910] sm:$0xff]
    %v423 = vld [vmem:[#allocation2 + $0x918] sm:$0xff]
    %v424 = vld [vmem:[#allocation2 + $0x920] sm:$0xff]
    %v425 = vld [vmem:[#allocation2 + $0x928] sm:$0xff]
    %v426 = vld [vmem:[#allocation2 + $0x930] sm:$0xff]
    %v427 = vld [vmem:[#allocation2 + $0x938] sm:$0xff]
    %v428 = vld [vmem:[#allocation2 + $0x940] sm:$0xff]
    %v429 = vld [vmem:[#allocation2 + $0x948] sm:$0xff]
    %v430 = vld [vmem:[#allocation2 + $0x950] sm:$0xff]
    %v431 = vld [vmem:[#allocation2 + $0x958] sm:$0xff]
    %v432 = vld [vmem:[#allocation2 + $0x960] sm:$0xff]
    %v433 = vld [vmem:[#allocation2 + $0x968] sm:$0xff]
    %v434 = vld [vmem:[#allocation2 + $0x970] sm:$0xff]
    %v435 = vld [vmem:[#allocation2 + $0x978] sm:$0xff]
    %v436 = vld [vmem:[#allocation2 + $0x980] sm:$0xff]
    %v437 = vld [vmem:[#allocation2 + $0x988] sm:$0xff]
    %v438 = vld [vmem:[#allocation2 + $0x990] sm:$0xff]
    %v439 = vld [vmem:[#allocation2 + $0x998] sm:$0xff]
    %v440 = vld [vmem:[#allocation2 + $0x9a0] sm:$0xff]
    %v441 = vld [vmem:[#allocation2 + $0x9a8] sm:$0xff]
    %v442 = vld [vmem:[#allocation2 + $0x9b0] sm:$0xff]
    %v443 = vld [vmem:[#allocation2 + $0x9b8] sm:$0xff]
    %v444 = vld [vmem:[#allocation2 + $0x9c0] sm:$0xff]
    %v445 = vld [vmem:[#allocation2 + $0x9c8] sm:$0xff]
    %v446 = vld [vmem:[#allocation2 + $0x9d0] sm:$0xff]
    %v447 = vld [vmem:[#allocation2 + $0x9d8] sm:$0xff]
    %v448 = vld [vmem:[#allocation2 + $0x9e0] sm:$0xff]
    %v449 = vld [vmem:[#allocation2 + $0x9e8] sm:$0xff]
    %v450 = vld [vmem:[#allocation2 + $0x9f0] sm:$0xff]
    %v451 = vld [vmem:[#allocation2 + $0x9f8] sm:$0xff]
    %v452 = vld [vmem:[#allocation2 + $0xa00] sm:$0xff]
    %v453 = vld [vmem:[#allocation2 + $0xa08] sm:$0xff]
    %v454 = vld [vmem:[#allocation2 + $0xa10] sm:$0xff]
    %v455 = vld [vmem:[#allocation2 + $0xa18] sm:$0xff]
    %v456 = vld [vmem:[#allocation2 + $0xa20] sm:$0xff]
    %v457 = vld [vmem:[#allocation2 + $0xa28] sm:$0xff]
    %v458 = vld [vmem:[#allocation2 + $0xa30] sm:$0xff]
    %v459 = vld [vmem:[#allocation2 + $0xa38] sm:$0xff]
    %v460 = vld [vmem:[#allocation2 + $0xa40] sm:$0xff]
    %v461 = vld [vmem:[#allocation2 + $0xa48] sm:$0xff]
    %v462 = vld [vmem:[#allocation2 + $0xa50] sm:$0xff]
    %v463 = vld [vmem:[#allocation2 + $0xa58] sm:$0xff]
    %v464 = vld [vmem:[#allocation2 + $0xa60] sm:$0xff]
    %v465 = vld [vmem:[#allocation2 + $0xa68] sm:$0xff]
    %v466 = vld [vmem:[#allocation2 + $0xa70] sm:$0xff]
    %v467 = vld [vmem:[#allocation2 + $0xa78] sm:$0xff]
    %v468 = vld [vmem:[#allocation2 + $0xa80] sm:$0xff]
    %v469 = vld [vmem:[#allocation2 + $0xa88] sm:$0xff]
    %v470 = vld [vmem:[#allocation2 + $0xa90] sm:$0xff]
    %v471 = vld [vmem:[#allocation2 + $0xa98] sm:$0xff]
    %v472 = vld [vmem:[#allocation2 + $0xaa0] sm:$0xff]
    %v473 = vld [vmem:[#allocation2 + $0xaa8] sm:$0xff]
    %v474 = vld [vmem:[#allocation2 + $0xab0] sm:$0xff]
    %v475 = vld [vmem:[#allocation2 + $0xab8] sm:$0xff]
    %v476 = vld [vmem:[#allocation2 + $0xac0] sm:$0xff]
    %v477 = vld [vmem:[#allocation2 + $0xac8] sm:$0xff]
    %v478 = vld [vmem:[#allocation2 + $0xad0] sm:$0xff]
    %v479 = vld [vmem:[#allocation2 + $0xad8] sm:$0xff]
    %v480 = vld [vmem:[#allocation2 + $0xae0] sm:$0xff]
    %v481 = vld [vmem:[#allocation2 + $0xae8] sm:$0xff]
    %v482 = vld [vmem:[#allocation2 + $0xaf0] sm:$0xff]
    %v483 = vld [vmem:[#allocation2 + $0xaf8] sm:$0xff]
    %v484 = vld [vmem:[#allocation2 + $0xb00] sm:$0xff]
    %v485 = vld [vmem:[#allocation2 + $0xb08] sm:$0xff]
    %v486 = vld [vmem:[#allocation2 + $0xb10] sm:$0xff]
    %v487 = vld [vmem:[#allocation2 + $0xb18] sm:$0xff]
    %v488 = vld [vmem:[#allocation2 + $0xb20] sm:$0xff]
    %v489 = vld [vmem:[#allocation2 + $0xb28] sm:$0xff]
    %v490 = vld [vmem:[#allocation2 + $0xb30] sm:$0xff]
    %v491 = vld [vmem:[#allocation2 + $0xb38] sm:$0xff]
    %v492 = vld [vmem:[#allocation2 + $0xb40] sm:$0xff]
    %v493 = vld [vmem:[#allocation2 + $0xb48] sm:$0xff]
    %v494 = vld [vmem:[#allocation2 + $0xb50] sm:$0xff]
    %v495 = vld [vmem:[#allocation2 + $0xb58] sm:$0xff]
    %v496 = vld [vmem:[#allocation2 + $0xb60] sm:$0xff]
    %v497 = vld [vmem:[#allocation2 + $0xb68] sm:$0xff]
    %v498 = vld [vmem:[#allocation2 + $0xb70] sm:$0xff]
    %v499 = vld [vmem:[#allocation2 + $0xb78] sm:$0xff]
    %v500 = vld [vmem:[#allocation4] sm:$0x3]
    %v502 = vlaneseq
    %v503 = vshrl.u32 %v502, 7
    %v504 = vsub.s32 0, %v503
    %v505 = vrot.slane %v500, %v504
    %v506 = vlaneseq
    %v507 = vshrl.u32 %v506, 7
    %v508 = vsub.s32 1, %v507
    %v509 = vrot.slane %v500, %v508
    %v524 = vunpack.c.l.b16 %v120
    %v525 = vunpack.c.h.b16 %v120
    %v526 = vunpack.c.l.b16 %v121
    %v527 = vunpack.c.h.b16 %v121
    %v528 = vunpack.c.l.b16 %v122
    %v529 = vunpack.c.h.b16 %v122
    %v530 = vunpack.c.l.b16 %v123
    %v531 = vunpack.c.h.b16 %v123
    %v532 = vunpack.c.l.b16 %v124
    %v533 = vunpack.c.h.b16 %v124
    %v534 = vunpack.c.l.b16 %v125
    %v535 = vunpack.c.h.b16 %v125
    %v536 = vunpack.c.l.b16 %v126
    %v537 = vunpack.c.h.b16 %v126
    %v538 = vunpack.c.l.b16 %v127
    %v539 = vunpack.c.h.b16 %v127
    %v540 = vunpack.c.l.b16 %v128
    %v541 = vunpack.c.h.b16 %v128
    %v542 = vunpack.c.l.b16 %v129
    %v543 = vunpack.c.h.b16 %v129
    %v544 = vunpack.c.l.b16 %v130
    %v545 = vunpack.c.h.b16 %v130
    %v546 = vunpack.c.l.b16 %v131
    %v547 = vpack.c.b16 %v524, %v524
    %v548 = vpack.c.b16 %v525, %v525
    %v549 = vpack.c.b16 %v526, %v526
    %v550 = vpack.c.b16 %v527, %v527
    %v551 = vpack.c.b16 %v528, %v528
    %v552 = vpack.c.b16 %v529, %v529
    %v553 = vpack.c.b16 %v530, %v530
    %v554 = vpack.c.b16 %v531, %v531
    %v555 = vpack.c.b16 %v532, %v532
    %v556 = vpack.c.b16 %v533, %v533
    %v557 = vpack.c.b16 %v534, %v534
    %v558 = vpack.c.b16 %v535, %v535
    %v559 = vpack.c.b16 %v536, %v536
    %v560 = vpack.c.b16 %v537, %v537
    %v561 = vpack.c.b16 %v538, %v538
    %v562 = vpack.c.b16 %v539, %v539
    %v563 = vpack.c.b16 %v540, %v540
    %v564 = vpack.c.b16 %v541, %v541
    %v565 = vpack.c.b16 %v542, %v542
    %v566 = vpack.c.b16 %v543, %v543
    %v567 = vpack.c.b16 %v544, %v544
    %v568 = vpack.c.b16 %v545, %v545
    %v569 = vpack.c.b16 %v546, %v546
    %v961 = vunpack.c.l.b16 %v132
    %v962 = vunpack.c.h.b16 %v132
    %v963 = vunpack.c.l.b16 %v133
    %v964 = vunpack.c.h.b16 %v133
    %v965 = vunpack.c.l.b16 %v134
    %v966 = vunpack.c.h.b16 %v134
    %v967 = vunpack.c.l.b16 %v135
    %v968 = vunpack.c.h.b16 %v135
    %v969 = vunpack.c.l.b16 %v136
    %v970 = vunpack.c.h.b16 %v136
    %v971 = vunpack.c.l.b16 %v137
    %v972 = vunpack.c.h.b16 %v137
    %v973 = vunpack.c.l.b16 %v138
    %v974 = vunpack.c.h.b16 %v138
    %v975 = vunpack.c.l.b16 %v139
    %v976 = vunpack.c.h.b16 %v139
    %v977 = vunpack.c.l.b16 %v140
    %v978 = vunpack.c.h.b16 %v140
    %v979 = vunpack.c.l.b16 %v141
    %v980 = vunpack.c.h.b16 %v141
    %v981 = vunpack.c.l.b16 %v142
    %v982 = vunpack.c.h.b16 %v142
    %v983 = vunpack.c.l.b16 %v143
    %v984 = vunpack.c.h.b16 %v143
    %v985 = vunpack.c.l.b16 %v144
    %v986 = vunpack.c.h.b16 %v144
    %v987 = vunpack.c.l.b16 %v145
    %v988 = vunpack.c.h.b16 %v145
    %v989 = vunpack.c.l.b16 %v146
    %v990 = vunpack.c.h.b16 %v146
    %v991 = vunpack.c.l.b16 %v147
    %v992 = vunpack.c.h.b16 %v147
    %v993 = vunpack.c.l.b16 %v148
    %v994 = vunpack.c.h.b16 %v148
    %v995 = vunpack.c.l.b16 %v149
    %v996 = vunpack.c.h.b16 %v149
    %v997 = vunpack.c.l.b16 %v150
    %v998 = vunpack.c.h.b16 %v150
    %v999 = vunpack.c.l.b16 %v151
    %v1000 = vunpack.c.h.b16 %v151
    %v1001 = vunpack.c.l.b16 %v152
    %v1002 = vunpack.c.h.b16 %v152
    %v1003 = vunpack.c.l.b16 %v153
    %v1004 = vunpack.c.h.b16 %v153
    %v1005 = vunpack.c.l.b16 %v154
    %v1006 = vunpack.c.h.b16 %v154
    %v1007 = vunpack.c.l.b16 %v155
    %v1008 = vunpack.c.h.b16 %v155
    %v1009 = vunpack.c.l.b16 %v156
    %v1010 = vunpack.c.h.b16 %v156
    %v1011 = vunpack.c.l.b16 %v157
    %v1012 = vunpack.c.h.b16 %v157
    %v1013 = vunpack.c.l.b16 %v158
    %v1014 = vunpack.c.h.b16 %v158
    %v1015 = vunpack.c.l.b16 %v159
    %v1016 = vunpack.c.h.b16 %v159
    %v1017 = vunpack.c.l.b16 %v160
    %v1018 = vunpack.c.h.b16 %v160
    %v1019 = vunpack.c.l.b16 %v161
    %v1020 = vunpack.c.h.b16 %v161
    %v1021 = vunpack.c.l.b16 %v162
    %v1022 = vunpack.c.h.b16 %v162
    %v1023 = vunpack.c.l.b16 %v163
    %v1024 = vunpack.c.h.b16 %v163
    %v1025 = vunpack.c.l.b16 %v164
    %v1026 = vunpack.c.h.b16 %v164
    %v1027 = vunpack.c.l.b16 %v165
    %v1028 = vunpack.c.h.b16 %v165
    %v1029 = vunpack.c.l.b16 %v166
    %v1030 = vunpack.c.h.b16 %v166
    %v1031 = vunpack.c.l.b16 %v167
    %v1032 = vunpack.c.h.b16 %v167
    %v1033 = vunpack.c.l.b16 %v168
    %v1034 = vunpack.c.h.b16 %v168
    %v1035 = vunpack.c.l.b16 %v169
    %v1036 = vunpack.c.h.b16 %v169
    %v1037 = vunpack.c.l.b16 %v170
    %v1038 = vunpack.c.h.b16 %v170
    %v1039 = vunpack.c.l.b16 %v171
    %v1040 = vunpack.c.h.b16 %v171
    %v1041 = vunpack.c.l.b16 %v172
    %v1042 = vunpack.c.h.b16 %v172
    %v1043 = vunpack.c.l.b16 %v173
    %v1044 = vunpack.c.h.b16 %v173
    %v1045 = vunpack.c.l.b16 %v174
    %v1046 = vunpack.c.h.b16 %v174
    %v1047 = vunpack.c.l.b16 %v175
    %v1048 = vunpack.c.h.b16 %v175
    %v1049 = vunpack.c.l.b16 %v176
    %v1050 = vunpack.c.h.b16 %v176
    %v1051 = vunpack.c.l.b16 %v177
    %v1052 = vunpack.c.h.b16 %v177
    %v1053 = vunpack.c.l.b16 %v178
    %v1054 = vunpack.c.h.b16 %v178
    %v1055 = vunpack.c.l.b16 %v179
    %v1056 = vunpack.c.h.b16 %v179
    %v1057 = vunpack.c.l.b16 %v180
    %v1058 = vunpack.c.h.b16 %v180
    %v1059 = vunpack.c.l.b16 %v181
    %v1060 = vunpack.c.h.b16 %v181
    %v1061 = vunpack.c.l.b16 %v182
    %v1062 = vunpack.c.h.b16 %v182
    %v1063 = vunpack.c.l.b16 %v183
    %v1064 = vunpack.c.h.b16 %v183
    %v1065 = vunpack.c.l.b16 %v184
    %v1066 = vunpack.c.h.b16 %v184
    %v1067 = vunpack.c.l.b16 %v185
    %v1068 = vunpack.c.h.b16 %v185
    %v1069 = vunpack.c.l.b16 %v186
    %v1070 = vunpack.c.h.b16 %v186
    %v1071 = vunpack.c.l.b16 %v187
    %v1072 = vunpack.c.h.b16 %v187
    %v1073 = vunpack.c.l.b16 %v188
    %v1074 = vunpack.c.h.b16 %v188
    %v1075 = vunpack.c.l.b16 %v189
    %v1076 = vunpack.c.h.b16 %v189
    %v1077 = vunpack.c.l.b16 %v190
    %v1078 = vunpack.c.h.b16 %v190
    %v1079 = vunpack.c.l.b16 %v191
    %v1080 = vunpack.c.h.b16 %v191
    %v1081 = vunpack.c.l.b16 %v192
    %v1082 = vunpack.c.h.b16 %v192
    %v1083 = vunpack.c.l.b16 %v193
    %v1084 = vunpack.c.h.b16 %v193
    %v1085 = vunpack.c.l.b16 %v194
    %v1086 = vunpack.c.h.b16 %v194
    %v1087 = vunpack.c.l.b16 %v195
    %v1088 = vunpack.c.h.b16 %v195
    %v1089 = vunpack.c.l.b16 %v196
    %v1090 = vunpack.c.h.b16 %v196
    %v1091 = vunpack.c.l.b16 %v197
    %v1092 = vunpack.c.h.b16 %v197
    %v1093 = vunpack.c.l.b16 %v198
    %v1094 = vunpack.c.h.b16 %v198
    %v1095 = vunpack.c.l.b16 %v199
    %v1096 = vunpack.c.h.b16 %v199
    %v1097 = vunpack.c.l.b16 %v200
    %v1098 = vunpack.c.h.b16 %v200
    %v1099 = vunpack.c.l.b16 %v201
    %v1100 = vunpack.c.h.b16 %v201
    %v1101 = vunpack.c.l.b16 %v202
    %v1102 = vunpack.c.h.b16 %v202
    %v1103 = vunpack.c.l.b16 %v203
    %v1104 = vunpack.c.h.b16 %v203
    %v1105 = vunpack.c.l.b16 %v204
    %v1106 = vunpack.c.h.b16 %v204
    %v1107 = vunpack.c.l.b16 %v205
    %v1108 = vunpack.c.h.b16 %v205
    %v1109 = vunpack.c.l.b16 %v206
    %v1110 = vunpack.c.h.b16 %v206
    %v1111 = vunpack.c.l.b16 %v207
    %v1112 = vunpack.c.h.b16 %v207
    %v1113 = vunpack.c.l.b16 %v208
    %v1114 = vunpack.c.h.b16 %v208
    %v1115 = vunpack.c.l.b16 %v209
    %v1116 = vunpack.c.h.b16 %v209
    %v1117 = vunpack.c.l.b16 %v210
    %v1118 = vunpack.c.h.b16 %v210
    %v1119 = vunpack.c.l.b16 %v211
    %v1120 = vunpack.c.h.b16 %v211
    %v1121 = vunpack.c.l.b16 %v212
    %v1122 = vunpack.c.h.b16 %v212
    %v1123 = vunpack.c.l.b16 %v213
    %v1124 = vunpack.c.h.b16 %v213
    %v1125 = vunpack.c.l.b16 %v214
    %v1126 = vunpack.c.h.b16 %v214
    %v1127 = vunpack.c.l.b16 %v215
    %v1128 = vunpack.c.h.b16 %v215
    %v1129 = vunpack.c.l.b16 %v216
    %v1130 = vunpack.c.h.b16 %v216
    %v1131 = vunpack.c.l.b16 %v217
    %v1132 = vunpack.c.h.b16 %v217
    %v1133 = vunpack.c.l.b16 %v218
    %v1134 = vunpack.c.h.b16 %v218
    %v1135 = vunpack.c.l.b16 %v219
    %v1136 = vunpack.c.h.b16 %v219
    %v1137 = vunpack.c.l.b16 %v220
    %v1138 = vunpack.c.h.b16 %v220
    %v1139 = vunpack.c.l.b16 %v221
    %v1140 = vunpack.c.h.b16 %v221
    %v1141 = vunpack.c.l.b16 %v222
    %v1142 = vunpack.c.h.b16 %v222
    %v1143 = vunpack.c.l.b16 %v223
    %v1144 = vunpack.c.h.b16 %v223
    %v1145 = vunpack.c.l.b16 %v224
    %v1146 = vunpack.c.h.b16 %v224
    %v1147 = vunpack.c.l.b16 %v225
    %v1148 = vunpack.c.h.b16 %v225
    %v1149 = vunpack.c.l.b16 %v226
    %v1150 = vunpack.c.h.b16 %v226
    %v1151 = vunpack.c.l.b16 %v227
    %v1152 = vunpack.c.h.b16 %v227
    %v1153 = vunpack.c.l.b16 %v228
    %v1154 = vunpack.c.h.b16 %v228
    %v1155 = vunpack.c.l.b16 %v229
    %v1156 = vunpack.c.h.b16 %v229
    %v1157 = vunpack.c.l.b16 %v230
    %v1158 = vunpack.c.h.b16 %v230
    %v1159 = vunpack.c.l.b16 %v231
    %v1160 = vunpack.c.h.b16 %v231
    %v1161 = vunpack.c.l.b16 %v232
    %v1162 = vunpack.c.h.b16 %v232
    %v1163 = vunpack.c.l.b16 %v233
    %v1164 = vunpack.c.h.b16 %v233
    %v1165 = vunpack.c.l.b16 %v234
    %v1166 = vunpack.c.h.b16 %v234
    %v1167 = vunpack.c.l.b16 %v235
    %v1168 = vunpack.c.h.b16 %v235
    %v1169 = vunpack.c.l.b16 %v236
    %v1170 = vunpack.c.h.b16 %v236
    %v1171 = vunpack.c.l.b16 %v237
    %v1172 = vunpack.c.h.b16 %v237
    %v1173 = vunpack.c.l.b16 %v238
    %v1174 = vunpack.c.h.b16 %v238
    %v1175 = vunpack.c.l.b16 %v239
    %v1176 = vunpack.c.h.b16 %v239
    %v1177 = vunpack.c.l.b16 %v240
    %v1178 = vunpack.c.h.b16 %v240
    %v1179 = vunpack.c.l.b16 %v241
    %v1180 = vunpack.c.h.b16 %v241
    %v1181 = vunpack.c.l.b16 %v242
    %v1182 = vunpack.c.h.b16 %v242
    %v1183 = vunpack.c.l.b16 %v243
    %v1184 = vunpack.c.h.b16 %v243
    %v1185 = vunpack.c.l.b16 %v244
    %v1186 = vunpack.c.h.b16 %v244
    %v1187 = vunpack.c.l.b16 %v245
    %v1188 = vunpack.c.h.b16 %v245
    %v1189 = vunpack.c.l.b16 %v246
    %v1190 = vunpack.c.h.b16 %v246
    %v1191 = vunpack.c.l.b16 %v247
    %v1192 = vunpack.c.h.b16 %v247
    %v1193 = vunpack.c.l.b16 %v248
    %v1194 = vunpack.c.h.b16 %v248
    %v1195 = vunpack.c.l.b16 %v249
    %v1196 = vunpack.c.h.b16 %v249
    %v1197 = vunpack.c.l.b16 %v250
    %v1198 = vunpack.c.h.b16 %v250
    %v1199 = vunpack.c.l.b16 %v251
    %v1200 = vunpack.c.h.b16 %v251
    %v1201 = vunpack.c.l.b16 %v252
    %v1202 = vunpack.c.h.b16 %v252
    %v1203 = vunpack.c.l.b16 %v253
    %v1204 = vunpack.c.h.b16 %v253
    %v1205 = vunpack.c.l.b16 %v254
    %v1206 = vunpack.c.h.b16 %v254
    %v1207 = vunpack.c.l.b16 %v255
    %v1208 = vunpack.c.h.b16 %v255
    %v1209 = vunpack.c.l.b16 %v256
    %v1210 = vunpack.c.h.b16 %v256
    %v1211 = vunpack.c.l.b16 %v257
    %v1212 = vunpack.c.h.b16 %v257
    %v1213 = vunpack.c.l.b16 %v258
    %v1214 = vunpack.c.h.b16 %v258
    %v1215 = vunpack.c.l.b16 %v259
    %v1216 = vunpack.c.h.b16 %v259
    %v1217 = vunpack.c.l.b16 %v260
    %v1218 = vunpack.c.h.b16 %v260
    %v1219 = vunpack.c.l.b16 %v261
    %v1220 = vunpack.c.h.b16 %v261
    %v1221 = vunpack.c.l.b16 %v262
    %v1222 = vunpack.c.h.b16 %v262
    %v1223 = vunpack.c.l.b16 %v263
    %v1224 = vunpack.c.h.b16 %v263
    %v1225 = vunpack.c.l.b16 %v264
    %v1226 = vunpack.c.h.b16 %v264
    %v1227 = vunpack.c.l.b16 %v265
    %v1228 = vunpack.c.h.b16 %v265
    %v1229 = vunpack.c.l.b16 %v266
    %v1230 = vunpack.c.h.b16 %v266
    %v1231 = vunpack.c.l.b16 %v267
    %v1232 = vunpack.c.h.b16 %v267
    %v1233 = vunpack.c.l.b16 %v268
    %v1234 = vunpack.c.h.b16 %v268
    %v1235 = vunpack.c.l.b16 %v269
    %v1236 = vunpack.c.h.b16 %v269
    %v1237 = vunpack.c.l.b16 %v270
    %v1238 = vunpack.c.h.b16 %v270
    %v1239 = vunpack.c.l.b16 %v271
    %v1240 = vunpack.c.h.b16 %v271
    %v1241 = vunpack.c.l.b16 %v272
    %v1242 = vunpack.c.h.b16 %v272
    %v1243 = vunpack.c.l.b16 %v273
    %v1244 = vunpack.c.h.b16 %v273
    %v1245 = vunpack.c.l.b16 %v274
    %v1246 = vunpack.c.h.b16 %v274
    %v1247 = vunpack.c.l.b16 %v275
    %v1248 = vunpack.c.h.b16 %v275
    %v1249 = vunpack.c.l.b16 %v276
    %v1250 = vunpack.c.h.b16 %v276
    %v1251 = vunpack.c.l.b16 %v277
    %v1252 = vunpack.c.h.b16 %v277
    %v1253 = vunpack.c.l.b16 %v278
    %v1254 = vunpack.c.h.b16 %v278
    %v1255 = vunpack.c.l.b16 %v279
    %v1256 = vunpack.c.h.b16 %v279
    %v1257 = vunpack.c.l.b16 %v280
    %v1258 = vunpack.c.h.b16 %v280
    %v1259 = vunpack.c.l.b16 %v281
    %v1260 = vunpack.c.h.b16 %v281
    %v1261 = vunpack.c.l.b16 %v282
    %v1262 = vunpack.c.h.b16 %v282
    %v1263 = vunpack.c.l.b16 %v283
    %v1264 = vunpack.c.h.b16 %v283
    %v1265 = vunpack.c.l.b16 %v284
    %v1266 = vunpack.c.h.b16 %v284
    %v1267 = vunpack.c.l.b16 %v285
    %v1268 = vunpack.c.h.b16 %v285
    %v1269 = vunpack.c.l.b16 %v286
    %v1270 = vunpack.c.h.b16 %v286
    %v1271 = vunpack.c.l.b16 %v287
    %v1272 = vunpack.c.h.b16 %v287
    %v1273 = vunpack.c.l.b16 %v288
    %v1274 = vunpack.c.h.b16 %v288
    %v1275 = vunpack.c.l.b16 %v289
    %v1276 = vunpack.c.h.b16 %v289
    %v1277 = vunpack.c.l.b16 %v290
    %v1278 = vunpack.c.h.b16 %v290
    %v1279 = vunpack.c.l.b16 %v291
    %v1280 = vunpack.c.h.b16 %v291
    %v1281 = vunpack.c.l.b16 %v292
    %v1282 = vunpack.c.h.b16 %v292
    %v1283 = vunpack.c.l.b16 %v293
    %v1284 = vunpack.c.h.b16 %v293
    %v1285 = vunpack.c.l.b16 %v294
    %v1286 = vunpack.c.h.b16 %v294
    %v1287 = vunpack.c.l.b16 %v295
    %v1288 = vunpack.c.h.b16 %v295
    %v1289 = vunpack.c.l.b16 %v296
    %v1290 = vunpack.c.h.b16 %v296
    %v1291 = vunpack.c.l.b16 %v297
    %v1292 = vunpack.c.h.b16 %v297
    %v1293 = vunpack.c.l.b16 %v298
    %v1294 = vunpack.c.h.b16 %v298
    %v1295 = vunpack.c.l.b16 %v299
    %v1296 = vunpack.c.h.b16 %v299
    %v1297 = vunpack.c.l.b16 %v300
    %v1298 = vunpack.c.h.b16 %v300
    %v1299 = vunpack.c.l.b16 %v301
    %v1300 = vunpack.c.h.b16 %v301
    %v1301 = vunpack.c.l.b16 %v302
    %v1302 = vunpack.c.h.b16 %v302
    %v1303 = vunpack.c.l.b16 %v303
    %v1304 = vunpack.c.h.b16 %v303
    %v1305 = vunpack.c.l.b16 %v304
    %v1306 = vunpack.c.h.b16 %v304
    %v1307 = vunpack.c.l.b16 %v305
    %v1308 = vunpack.c.h.b16 %v305
    %v1309 = vunpack.c.l.b16 %v306
    %v1310 = vunpack.c.h.b16 %v306
    %v1311 = vunpack.c.l.b16 %v307
    %v1312 = vunpack.c.h.b16 %v307
    %v1313 = vunpack.c.l.b16 %v308
    %v1314 = vunpack.c.h.b16 %v308
    %v1315 = vunpack.c.l.b16 %v309
    %v1316 = vunpack.c.h.b16 %v309
    %v1317 = vunpack.c.l.b16 %v310
    %v1318 = vunpack.c.h.b16 %v310
    %v1319 = vunpack.c.l.b16 %v311
    %v1320 = vunpack.c.h.b16 %v311
    %v1321 = vunpack.c.l.b16 %v312
    %v1322 = vunpack.c.h.b16 %v312
    %v1323 = vunpack.c.l.b16 %v313
    %v1324 = vunpack.c.h.b16 %v313
    %v1325 = vunpack.c.l.b16 %v314
    %v1326 = vunpack.c.h.b16 %v314
    %v1327 = vunpack.c.l.b16 %v315
    %v1328 = vunpack.c.h.b16 %v315
    %v1329 = vunpack.c.l.b16 %v316
    %v1330 = vunpack.c.h.b16 %v316
    %v1331 = vunpack.c.l.b16 %v317
    %v1332 = vunpack.c.h.b16 %v317
    %v1333 = vunpack.c.l.b16 %v318
    %v1334 = vunpack.c.h.b16 %v318
    %v1335 = vunpack.c.l.b16 %v319
    %v1336 = vunpack.c.h.b16 %v319
    %v1337 = vunpack.c.l.b16 %v320
    %v1338 = vunpack.c.h.b16 %v320
    %v1339 = vunpack.c.l.b16 %v321
    %v1340 = vunpack.c.h.b16 %v321
    %v1341 = vunpack.c.l.b16 %v322
    %v1342 = vunpack.c.h.b16 %v322
    %v1343 = vunpack.c.l.b16 %v323
    %v1344 = vunpack.c.h.b16 %v323
    %v1345 = vunpack.c.l.b16 %v324
    %v1346 = vunpack.c.h.b16 %v324
    %v1347 = vunpack.c.l.b16 %v325
    %v1348 = vunpack.c.h.b16 %v325
    %v1349 = vunpack.c.l.b16 %v326
    %v1350 = vunpack.c.h.b16 %v326
    %v1351 = vunpack.c.l.b16 %v327
    %v1352 = vunpack.c.h.b16 %v327
    %v1353 = vunpack.c.l.b16 %v328
    %v1354 = vunpack.c.h.b16 %v328
    %v1355 = vunpack.c.l.b16 %v329
    %v1356 = vunpack.c.h.b16 %v329
    %v1357 = vunpack.c.l.b16 %v330
    %v1358 = vunpack.c.h.b16 %v330
    %v1359 = vunpack.c.l.b16 %v331
    %v1360 = vunpack.c.h.b16 %v331
    %v1361 = vunpack.c.l.b16 %v332
    %v1362 = vunpack.c.h.b16 %v332
    %v1363 = vunpack.c.l.b16 %v333
    %v1364 = vunpack.c.h.b16 %v333
    %v1365 = vunpack.c.l.b16 %v334
    %v1366 = vunpack.c.h.b16 %v334
    %v1367 = vunpack.c.l.b16 %v335
    %v1368 = vunpack.c.h.b16 %v335
    %v1369 = vunpack.c.l.b16 %v336
    %v1370 = vunpack.c.h.b16 %v336
    %v1371 = vunpack.c.l.b16 %v337
    %v1372 = vunpack.c.h.b16 %v337
    %v1373 = vunpack.c.l.b16 %v338
    %v1374 = vunpack.c.h.b16 %v338
    %v1375 = vunpack.c.l.b16 %v339
    %v1376 = vunpack.c.h.b16 %v339
    %v1377 = vunpack.c.l.b16 %v340
    %v1378 = vunpack.c.h.b16 %v340
    %v1379 = vunpack.c.l.b16 %v341
    %v1380 = vunpack.c.h.b16 %v341
    %v1381 = vunpack.c.l.b16 %v342
    %v1382 = vunpack.c.h.b16 %v342
    %v1383 = vunpack.c.l.b16 %v343
    %v1384 = vunpack.c.h.b16 %v343
    %v1385 = vunpack.c.l.b16 %v344
    %v1386 = vunpack.c.h.b16 %v344
    %v1387 = vunpack.c.l.b16 %v345
    %v1388 = vunpack.c.h.b16 %v345
    %v1389 = vunpack.c.l.b16 %v346
    %v1390 = vunpack.c.h.b16 %v346
    %v1391 = vunpack.c.l.b16 %v347
    %v1392 = vunpack.c.h.b16 %v347
    %v1393 = vunpack.c.l.b16 %v348
    %v1394 = vunpack.c.h.b16 %v348
    %v1395 = vunpack.c.l.b16 %v349
    %v1396 = vunpack.c.h.b16 %v349
    %v1397 = vunpack.c.l.b16 %v350
    %v1398 = vunpack.c.h.b16 %v350
    %v1399 = vunpack.c.l.b16 %v351
    %v1400 = vunpack.c.h.b16 %v351
    %v1401 = vunpack.c.l.b16 %v352
    %v1402 = vunpack.c.h.b16 %v352
    %v1403 = vunpack.c.l.b16 %v353
    %v1404 = vunpack.c.h.b16 %v353
    %v1405 = vunpack.c.l.b16 %v354
    %v1406 = vunpack.c.h.b16 %v354
    %v1407 = vunpack.c.l.b16 %v355
    %v1408 = vunpack.c.h.b16 %v355
    %v1409 = vunpack.c.l.b16 %v356
    %v1410 = vunpack.c.h.b16 %v356
    %v1411 = vunpack.c.l.b16 %v357
    %v1412 = vunpack.c.h.b16 %v357
    %v1413 = vunpack.c.l.b16 %v358
    %v1414 = vunpack.c.h.b16 %v358
    %v1415 = vunpack.c.l.b16 %v359
    %v1416 = vunpack.c.h.b16 %v359
    %v1417 = vunpack.c.l.b16 %v360
    %v1418 = vunpack.c.h.b16 %v360
    %v1419 = vunpack.c.l.b16 %v361
    %v1420 = vunpack.c.h.b16 %v361
    %v1421 = vunpack.c.l.b16 %v362
    %v1422 = vunpack.c.h.b16 %v362
    %v1423 = vunpack.c.l.b16 %v363
    %v1424 = vunpack.c.h.b16 %v363
    %v1425 = vunpack.c.l.b16 %v364
    %v1426 = vunpack.c.h.b16 %v364
    %v1427 = vunpack.c.l.b16 %v365
    %v1428 = vunpack.c.h.b16 %v365
    %v1429 = vunpack.c.l.b16 %v366
    %v1430 = vunpack.c.h.b16 %v366
    %v1431 = vunpack.c.l.b16 %v367
    %v1432 = vunpack.c.h.b16 %v367
    %v1433 = vunpack.c.l.b16 %v368
    %v1434 = vunpack.c.h.b16 %v368
    %v1435 = vunpack.c.l.b16 %v369
    %v1436 = vunpack.c.h.b16 %v369
    %v1437 = vunpack.c.l.b16 %v370
    %v1438 = vunpack.c.h.b16 %v370
    %v1439 = vunpack.c.l.b16 %v371
    %v1440 = vunpack.c.h.b16 %v371
    %v1441 = vunpack.c.l.b16 %v372
    %v1442 = vunpack.c.h.b16 %v372
    %v1443 = vunpack.c.l.b16 %v373
    %v1444 = vunpack.c.h.b16 %v373
    %v1445 = vunpack.c.l.b16 %v374
    %v1446 = vunpack.c.h.b16 %v374
    %v1447 = vunpack.c.l.b16 %v375
    %v1448 = vunpack.c.h.b16 %v375
    %v1449 = vunpack.c.l.b16 %v376
    %v1450 = vunpack.c.h.b16 %v376
    %v1451 = vunpack.c.l.b16 %v377
    %v1452 = vunpack.c.h.b16 %v377
    %v1453 = vunpack.c.l.b16 %v378
    %v1454 = vunpack.c.h.b16 %v378
    %v1455 = vunpack.c.l.b16 %v379
    %v1456 = vunpack.c.h.b16 %v379
    %v1457 = vunpack.c.l.b16 %v380
    %v1458 = vunpack.c.h.b16 %v380
    %v1459 = vunpack.c.l.b16 %v381
    %v1460 = vunpack.c.h.b16 %v381
    %v1461 = vunpack.c.l.b16 %v382
    %v1462 = vunpack.c.h.b16 %v382
    %v1463 = vunpack.c.l.b16 %v383
    %v1464 = vunpack.c.h.b16 %v383
    %v1465 = vunpack.c.l.b16 %v384
    %v1466 = vunpack.c.h.b16 %v384
    %v1467 = vunpack.c.l.b16 %v385
    %v1468 = vunpack.c.h.b16 %v385
    %v1469 = vunpack.c.l.b16 %v386
    %v1470 = vunpack.c.h.b16 %v386
    %v1471 = vunpack.c.l.b16 %v387
    %v1472 = vunpack.c.h.b16 %v387
    %v1473 = vunpack.c.l.b16 %v388
    %v1474 = vunpack.c.h.b16 %v388
    %v1475 = vunpack.c.l.b16 %v389
    %v1476 = vunpack.c.h.b16 %v389
    %v1477 = vunpack.c.l.b16 %v390
    %v1478 = vunpack.c.h.b16 %v390
    %v1479 = vunpack.c.l.b16 %v391
    %v1480 = vunpack.c.h.b16 %v391
    %v1481 = vunpack.c.l.b16 %v392
    %v1482 = vunpack.c.h.b16 %v392
    %v1483 = vunpack.c.l.b16 %v393
    %v1484 = vunpack.c.h.b16 %v393
    %v1485 = vunpack.c.l.b16 %v394
    %v1486 = vunpack.c.h.b16 %v394
    %v1487 = vunpack.c.l.b16 %v395
    %v1488 = vunpack.c.h.b16 %v395
    %v1489 = vunpack.c.l.b16 %v396
    %v1490 = vunpack.c.h.b16 %v396
    %v1491 = vunpack.c.l.b16 %v397
    %v1492 = vunpack.c.h.b16 %v397
    %v1493 = vunpack.c.l.b16 %v398
    %v1494 = vunpack.c.h.b16 %v398
    %v1495 = vunpack.c.l.b16 %v399
    %v1496 = vunpack.c.h.b16 %v399
    %v1497 = vunpack.c.l.b16 %v400
    %v1498 = vunpack.c.h.b16 %v400
    %v1499 = vunpack.c.l.b16 %v401
    %v1500 = vunpack.c.h.b16 %v401
    %v1501 = vunpack.c.l.b16 %v402
    %v1502 = vunpack.c.h.b16 %v402
    %v1503 = vunpack.c.l.b16 %v403
    %v1504 = vunpack.c.h.b16 %v403
    %v1505 = vunpack.c.l.b16 %v404
    %v1506 = vunpack.c.h.b16 %v404
    %v1507 = vunpack.c.l.b16 %v405
    %v1508 = vunpack.c.h.b16 %v405
    %v1509 = vunpack.c.l.b16 %v406
    %v1510 = vunpack.c.h.b16 %v406
    %v1511 = vunpack.c.l.b16 %v407
    %v1512 = vunpack.c.h.b16 %v407
    %v1513 = vunpack.c.l.b16 %v408
    %v1514 = vunpack.c.h.b16 %v408
    %v1515 = vunpack.c.l.b16 %v409
    %v1516 = vunpack.c.h.b16 %v409
    %v1517 = vunpack.c.l.b16 %v410
    %v1518 = vunpack.c.h.b16 %v410
    %v1519 = vunpack.c.l.b16 %v411
    %v1520 = vunpack.c.h.b16 %v411
    %v1521 = vunpack.c.l.b16 %v412
    %v1522 = vunpack.c.h.b16 %v412
    %v1523 = vunpack.c.l.b16 %v413
    %v1524 = vunpack.c.h.b16 %v413
    %v1525 = vunpack.c.l.b16 %v414
    %v1526 = vunpack.c.h.b16 %v414
    %v1527 = vunpack.c.l.b16 %v415
    %v1528 = vunpack.c.h.b16 %v415
    %v1529 = vunpack.c.l.b16 %v416
    %v1530 = vunpack.c.h.b16 %v416
    %v1531 = vunpack.c.l.b16 %v417
    %v1532 = vunpack.c.h.b16 %v417
    %v1533 = vunpack.c.l.b16 %v418
    %v1534 = vunpack.c.h.b16 %v418
    %v1535 = vunpack.c.l.b16 %v419
    %v1536 = vunpack.c.h.b16 %v419
    %v1537 = vunpack.c.l.b16 %v420
    %v1538 = vunpack.c.h.b16 %v420
    %v1539 = vunpack.c.l.b16 %v421
    %v1540 = vunpack.c.h.b16 %v421
    %v1541 = vunpack.c.l.b16 %v422
    %v1542 = vunpack.c.h.b16 %v422
    %v1543 = vunpack.c.l.b16 %v423
    %v1544 = vunpack.c.h.b16 %v423
    %v1545 = vunpack.c.l.b16 %v424
    %v1546 = vunpack.c.h.b16 %v424
    %v1547 = vunpack.c.l.b16 %v425
    %v1548 = vunpack.c.h.b16 %v425
    %v1549 = vunpack.c.l.b16 %v426
    %v1550 = vunpack.c.h.b16 %v426
    %v1551 = vunpack.c.l.b16 %v427
    %v1552 = vunpack.c.h.b16 %v427
    %v1553 = vunpack.c.l.b16 %v428
    %v1554 = vunpack.c.h.b16 %v428
    %v1555 = vunpack.c.l.b16 %v429
    %v1556 = vunpack.c.h.b16 %v429
    %v1557 = vunpack.c.l.b16 %v430
    %v1558 = vunpack.c.h.b16 %v430
    %v1559 = vunpack.c.l.b16 %v431
    %v1560 = vunpack.c.h.b16 %v431
    %v1561 = vunpack.c.l.b16 %v432
    %v1562 = vunpack.c.h.b16 %v432
    %v1563 = vunpack.c.l.b16 %v433
    %v1564 = vunpack.c.h.b16 %v433
    %v1565 = vunpack.c.l.b16 %v434
    %v1566 = vunpack.c.h.b16 %v434
    %v1567 = vunpack.c.l.b16 %v435
    %v1568 = vunpack.c.h.b16 %v435
    %v1569 = vunpack.c.l.b16 %v436
    %v1570 = vunpack.c.h.b16 %v436
    %v1571 = vunpack.c.l.b16 %v437
    %v1572 = vunpack.c.h.b16 %v437
    %v1573 = vunpack.c.l.b16 %v438
    %v1574 = vunpack.c.h.b16 %v438
    %v1575 = vunpack.c.l.b16 %v439
    %v1576 = vunpack.c.h.b16 %v439
    %v1577 = vunpack.c.l.b16 %v440
    %v1578 = vunpack.c.h.b16 %v440
    %v1579 = vunpack.c.l.b16 %v441
    %v1580 = vunpack.c.h.b16 %v441
    %v1581 = vunpack.c.l.b16 %v442
    %v1582 = vunpack.c.h.b16 %v442
    %v1583 = vunpack.c.l.b16 %v443
    %v1584 = vunpack.c.h.b16 %v443
    %v1585 = vunpack.c.l.b16 %v444
    %v1586 = vunpack.c.h.b16 %v444
    %v1587 = vunpack.c.l.b16 %v445
    %v1588 = vunpack.c.h.b16 %v445
    %v1589 = vunpack.c.l.b16 %v446
    %v1590 = vunpack.c.h.b16 %v446
    %v1591 = vunpack.c.l.b16 %v447
    %v1592 = vunpack.c.h.b16 %v447
    %v1593 = vunpack.c.l.b16 %v448
    %v1594 = vunpack.c.h.b16 %v448
    %v1595 = vunpack.c.l.b16 %v449
    %v1596 = vunpack.c.h.b16 %v449
    %v1597 = vunpack.c.l.b16 %v450
    %v1598 = vunpack.c.h.b16 %v450
    %v1599 = vunpack.c.l.b16 %v451
    %v1600 = vunpack.c.h.b16 %v451
    %v1601 = vunpack.c.l.b16 %v452
    %v1602 = vunpack.c.h.b16 %v452
    %v1603 = vunpack.c.l.b16 %v453
    %v1604 = vunpack.c.h.b16 %v453
    %v1605 = vunpack.c.l.b16 %v454
    %v1606 = vunpack.c.h.b16 %v454
    %v1607 = vunpack.c.l.b16 %v455
    %v1608 = vunpack.c.h.b16 %v455
    %v1609 = vunpack.c.l.b16 %v456
    %v1610 = vunpack.c.h.b16 %v456
    %v1611 = vunpack.c.l.b16 %v457
    %v1612 = vunpack.c.h.b16 %v457
    %v1613 = vunpack.c.l.b16 %v458
    %v1614 = vunpack.c.h.b16 %v458
    %v1615 = vunpack.c.l.b16 %v459
    %v1616 = vunpack.c.h.b16 %v459
    %v1617 = vunpack.c.l.b16 %v460
    %v1618 = vunpack.c.h.b16 %v460
    %v1619 = vunpack.c.l.b16 %v461
    %v1620 = vunpack.c.h.b16 %v461
    %v1621 = vunpack.c.l.b16 %v462
    %v1622 = vunpack.c.h.b16 %v462
    %v1623 = vunpack.c.l.b16 %v463
    %v1624 = vunpack.c.h.b16 %v463
    %v1625 = vunpack.c.l.b16 %v464
    %v1626 = vunpack.c.h.b16 %v464
    %v1627 = vunpack.c.l.b16 %v465
    %v1628 = vunpack.c.h.b16 %v465
    %v1629 = vunpack.c.l.b16 %v466
    %v1630 = vunpack.c.h.b16 %v466
    %v1631 = vunpack.c.l.b16 %v467
    %v1632 = vunpack.c.h.b16 %v467
    %v1633 = vunpack.c.l.b16 %v468
    %v1634 = vunpack.c.h.b16 %v468
    %v1635 = vunpack.c.l.b16 %v469
    %v1636 = vunpack.c.h.b16 %v469
    %v1637 = vunpack.c.l.b16 %v470
    %v1638 = vunpack.c.h.b16 %v470
    %v1639 = vunpack.c.l.b16 %v471
    %v1640 = vunpack.c.h.b16 %v471
    %v1641 = vunpack.c.l.b16 %v472
    %v1642 = vunpack.c.h.b16 %v472
    %v1643 = vunpack.c.l.b16 %v473
    %v1644 = vunpack.c.h.b16 %v473
    %v1645 = vunpack.c.l.b16 %v474
    %v1646 = vunpack.c.h.b16 %v474
    %v1647 = vunpack.c.l.b16 %v475
    %v1648 = vunpack.c.h.b16 %v475
    %v1649 = vunpack.c.l.b16 %v476
    %v1650 = vunpack.c.h.b16 %v476
    %v1651 = vunpack.c.l.b16 %v477
    %v1652 = vunpack.c.h.b16 %v477
    %v1653 = vunpack.c.l.b16 %v478
    %v1654 = vunpack.c.h.b16 %v478
    %v1655 = vunpack.c.l.b16 %v479
    %v1656 = vunpack.c.h.b16 %v479
    %v1657 = vunpack.c.l.b16 %v480
    %v1658 = vunpack.c.h.b16 %v480
    %v1659 = vunpack.c.l.b16 %v481
    %v1660 = vunpack.c.h.b16 %v481
    %v1661 = vunpack.c.l.b16 %v482
    %v1662 = vunpack.c.h.b16 %v482
    %v1663 = vunpack.c.l.b16 %v483
    %v1664 = vunpack.c.h.b16 %v483
    %v1665 = vunpack.c.l.b16 %v484
    %v1666 = vunpack.c.h.b16 %v484
    %v1667 = vunpack.c.l.b16 %v485
    %v1668 = vunpack.c.h.b16 %v485
    %v1669 = vunpack.c.l.b16 %v486
    %v1670 = vunpack.c.h.b16 %v486
    %v1671 = vunpack.c.l.b16 %v487
    %v1672 = vunpack.c.h.b16 %v487
    %v1673 = vunpack.c.l.b16 %v488
    %v1674 = vunpack.c.h.b16 %v488
    %v1675 = vunpack.c.l.b16 %v489
    %v1676 = vunpack.c.h.b16 %v489
    %v1677 = vunpack.c.l.b16 %v490
    %v1678 = vunpack.c.h.b16 %v490
    %v1679 = vunpack.c.l.b16 %v491
    %v1680 = vunpack.c.h.b16 %v491
    %v1681 = vunpack.c.l.b16 %v492
    %v1682 = vunpack.c.h.b16 %v492
    %v1683 = vunpack.c.l.b16 %v493
    %v1684 = vunpack.c.h.b16 %v493
    %v1685 = vunpack.c.l.b16 %v494
    %v1686 = vunpack.c.h.b16 %v494
    %v1687 = vunpack.c.l.b16 %v495
    %v1688 = vunpack.c.h.b16 %v495
    %v1689 = vunpack.c.l.b16 %v496
    %v1690 = vunpack.c.h.b16 %v496
    %v1691 = vunpack.c.l.b16 %v497
    %v1692 = vunpack.c.h.b16 %v497
    %v1693 = vunpack.c.l.b16 %v498
    %v1694 = vunpack.c.h.b16 %v498
    %v1695 = vunpack.c.l.b16 %v499
    %v1696 = vunpack.c.h.b16 %v499
    %v1697 = vpack.c.b16 %v963, %v961
    %v1698 = vpack.c.b16 %v964, %v962
    %v1699 = vpack.c.b16 %v967, %v965
    %v1700 = vpack.c.b16 %v968, %v966
    %v1701 = vpack.c.b16 %v971, %v969
    %v1702 = vpack.c.b16 %v972, %v970
    %v1703 = vpack.c.b16 %v975, %v973
    %v1704 = vpack.c.b16 %v976, %v974
    %v1705 = vpack.c.b16 %v979, %v977
    %v1706 = vpack.c.b16 %v980, %v978
    %v1707 = vpack.c.b16 %v983, %v981
    %v1708 = vpack.c.b16 %v984, %v982
    %v1709 = vpack.c.b16 %v987, %v985
    %v1710 = vpack.c.b16 %v988, %v986
    %v1711 = vpack.c.b16 %v991, %v989
    %v1712 = vpack.c.b16 %v992, %v990
    %v1713 = vpack.c.b16 %v995, %v993
    %v1714 = vpack.c.b16 %v996, %v994
    %v1715 = vpack.c.b16 %v999, %v997
    %v1716 = vpack.c.b16 %v1000, %v998
    %v1717 = vpack.c.b16 %v1003, %v1001
    %v1718 = vpack.c.b16 %v1004, %v1002
    %v1719 = vpack.c.b16 %v1007, %v1005
    %v1720 = vpack.c.b16 %v1008, %v1006
    %v1721 = vpack.c.b16 %v1011, %v1009
    %v1722 = vpack.c.b16 %v1012, %v1010
    %v1723 = vpack.c.b16 %v1015, %v1013
    %v1724 = vpack.c.b16 %v1016, %v1014
    %v1725 = vpack.c.b16 %v1019, %v1017
    %v1726 = vpack.c.b16 %v1020, %v1018
    %v1727 = vpack.c.b16 %v1023, %v1021
    %v1728 = vpack.c.b16 %v1024, %v1022
    %v1729 = vpack.c.b16 %v1027, %v1025
    %v1730 = vpack.c.b16 %v1028, %v1026
    %v1731 = vpack.c.b16 %v1031, %v1029
    %v1732 = vpack.c.b16 %v1032, %v1030
    %v1733 = vpack.c.b16 %v1035, %v1033
    %v1734 = vpack.c.b16 %v1036, %v1034
    %v1735 = vpack.c.b16 %v1039, %v1037
    %v1736 = vpack.c.b16 %v1040, %v1038
    %v1737 = vpack.c.b16 %v1043, %v1041
    %v1738 = vpack.c.b16 %v1044, %v1042
    %v1739 = vpack.c.b16 %v1047, %v1045
    %v1740 = vpack.c.b16 %v1048, %v1046
    %v1741 = vpack.c.b16 %v1051, %v1049
    %v1742 = vpack.c.b16 %v1052, %v1050
    %v1743 = vpack.c.b16 %v1055, %v1053
    %v1744 = vpack.c.b16 %v1056, %v1054
    %v1745 = vpack.c.b16 %v1059, %v1057
    %v1746 = vpack.c.b16 %v1060, %v1058
    %v1747 = vpack.c.b16 %v1063, %v1061
    %v1748 = vpack.c.b16 %v1064, %v1062
    %v1749 = vpack.c.b16 %v1067, %v1065
    %v1750 = vpack.c.b16 %v1068, %v1066
    %v1751 = vpack.c.b16 %v1071, %v1069
    %v1752 = vpack.c.b16 %v1072, %v1070
    %v1753 = vpack.c.b16 %v1075, %v1073
    %v1754 = vpack.c.b16 %v1076, %v1074
    %v1755 = vpack.c.b16 %v1079, %v1077
    %v1756 = vpack.c.b16 %v1080, %v1078
    %v1757 = vpack.c.b16 %v1083, %v1081
    %v1758 = vpack.c.b16 %v1084, %v1082
    %v1759 = vpack.c.b16 %v1087, %v1085
    %v1760 = vpack.c.b16 %v1088, %v1086
    %v1761 = vpack.c.b16 %v1091, %v1089
    %v1762 = vpack.c.b16 %v1092, %v1090
    %v1763 = vpack.c.b16 %v1095, %v1093
    %v1764 = vpack.c.b16 %v1096, %v1094
    %v1765 = vpack.c.b16 %v1099, %v1097
    %v1766 = vpack.c.b16 %v1100, %v1098
    %v1767 = vpack.c.b16 %v1103, %v1101
    %v1768 = vpack.c.b16 %v1104, %v1102
    %v1769 = vpack.c.b16 %v1107, %v1105
    %v1770 = vpack.c.b16 %v1108, %v1106
    %v1771 = vpack.c.b16 %v1111, %v1109
    %v1772 = vpack.c.b16 %v1112, %v1110
    %v1773 = vpack.c.b16 %v1115, %v1113
    %v1774 = vpack.c.b16 %v1116, %v1114
    %v1775 = vpack.c.b16 %v1119, %v1117
    %v1776 = vpack.c.b16 %v1120, %v1118
    %v1777 = vpack.c.b16 %v1123, %v1121
    %v1778 = vpack.c.b16 %v1124, %v1122
    %v1779 = vpack.c.b16 %v1127, %v1125
    %v1780 = vpack.c.b16 %v1128, %v1126
    %v1781 = vpack.c.b16 %v1131, %v1129
    %v1782 = vpack.c.b16 %v1132, %v1130
    %v1783 = vpack.c.b16 %v1135, %v1133
    %v1784 = vpack.c.b16 %v1136, %v1134
    %v1785 = vpack.c.b16 %v1139, %v1137
    %v1786 = vpack.c.b16 %v1140, %v1138
    %v1787 = vpack.c.b16 %v1143, %v1141
    %v1788 = vpack.c.b16 %v1144, %v1142
    %v1789 = vpack.c.b16 %v1147, %v1145
    %v1790 = vpack.c.b16 %v1148, %v1146
    %v1791 = vpack.c.b16 %v1151, %v1149
    %v1792 = vpack.c.b16 %v1152, %v1150
    %v1793 = vpack.c.b16 %v1155, %v1153
    %v1794 = vpack.c.b16 %v1156, %v1154
    %v1795 = vpack.c.b16 %v1159, %v1157
    %v1796 = vpack.c.b16 %v1160, %v1158
    %v1797 = vpack.c.b16 %v1163, %v1161
    %v1798 = vpack.c.b16 %v1164, %v1162
    %v1799 = vpack.c.b16 %v1167, %v1165
    %v1800 = vpack.c.b16 %v1168, %v1166
    %v1801 = vpack.c.b16 %v1171, %v1169
    %v1802 = vpack.c.b16 %v1172, %v1170
    %v1803 = vpack.c.b16 %v1175, %v1173
    %v1804 = vpack.c.b16 %v1176, %v1174
    %v1805 = vpack.c.b16 %v1179, %v1177
    %v1806 = vpack.c.b16 %v1180, %v1178
    %v1807 = vpack.c.b16 %v1183, %v1181
    %v1808 = vpack.c.b16 %v1184, %v1182
    %v1809 = vpack.c.b16 %v1187, %v1185
    %v1810 = vpack.c.b16 %v1188, %v1186
    %v1811 = vpack.c.b16 %v1191, %v1189
    %v1812 = vpack.c.b16 %v1192, %v1190
    %v1813 = vpack.c.b16 %v1195, %v1193
    %v1814 = vpack.c.b16 %v1196, %v1194
    %v1815 = vpack.c.b16 %v1199, %v1197
    %v1816 = vpack.c.b16 %v1200, %v1198
    %v1817 = vpack.c.b16 %v1203, %v1201
    %v1818 = vpack.c.b16 %v1204, %v1202
    %v1819 = vpack.c.b16 %v1207, %v1205
    %v1820 = vpack.c.b16 %v1208, %v1206
    %v1821 = vpack.c.b16 %v1211, %v1209
    %v1822 = vpack.c.b16 %v1212, %v1210
    %v1823 = vpack.c.b16 %v1215, %v1213
    %v1824 = vpack.c.b16 %v1216, %v1214
    %v1825 = vpack.c.b16 %v1219, %v1217
    %v1826 = vpack.c.b16 %v1220, %v1218
    %v1827 = vpack.c.b16 %v1223, %v1221
    %v1828 = vpack.c.b16 %v1224, %v1222
    %v1829 = vpack.c.b16 %v1227, %v1225
    %v1830 = vpack.c.b16 %v1228, %v1226
    %v1831 = vpack.c.b16 %v1231, %v1229
    %v1832 = vpack.c.b16 %v1232, %v1230
    %v1833 = vpack.c.b16 %v1235, %v1233
    %v1834 = vpack.c.b16 %v1236, %v1234
    %v1835 = vpack.c.b16 %v1239, %v1237
    %v1836 = vpack.c.b16 %v1240, %v1238
    %v1837 = vpack.c.b16 %v1243, %v1241
    %v1838 = vpack.c.b16 %v1244, %v1242
    %v1839 = vpack.c.b16 %v1247, %v1245
    %v1840 = vpack.c.b16 %v1248, %v1246
    %v1841 = vpack.c.b16 %v1251, %v1249
    %v1842 = vpack.c.b16 %v1252, %v1250
    %v1843 = vpack.c.b16 %v1255, %v1253
    %v1844 = vpack.c.b16 %v1256, %v1254
    %v1845 = vpack.c.b16 %v1259, %v1257
    %v1846 = vpack.c.b16 %v1260, %v1258
    %v1847 = vpack.c.b16 %v1263, %v1261
    %v1848 = vpack.c.b16 %v1264, %v1262
    %v1849 = vpack.c.b16 %v1267, %v1265
    %v1850 = vpack.c.b16 %v1268, %v1266
    %v1851 = vpack.c.b16 %v1271, %v1269
    %v1852 = vpack.c.b16 %v1272, %v1270
    %v1853 = vpack.c.b16 %v1275, %v1273
    %v1854 = vpack.c.b16 %v1276, %v1274
    %v1855 = vpack.c.b16 %v1279, %v1277
    %v1856 = vpack.c.b16 %v1280, %v1278
    %v1857 = vpack.c.b16 %v1283, %v1281
    %v1858 = vpack.c.b16 %v1284, %v1282
    %v1859 = vpack.c.b16 %v1287, %v1285
    %v1860 = vpack.c.b16 %v1288, %v1286
    %v1861 = vpack.c.b16 %v1291, %v1289
    %v1862 = vpack.c.b16 %v1292, %v1290
    %v1863 = vpack.c.b16 %v1295, %v1293
    %v1864 = vpack.c.b16 %v1296, %v1294
    %v1865 = vpack.c.b16 %v1299, %v1297
    %v1866 = vpack.c.b16 %v1300, %v1298
    %v1867 = vpack.c.b16 %v1303, %v1301
    %v1868 = vpack.c.b16 %v1304, %v1302
    %v1869 = vpack.c.b16 %v1307, %v1305
    %v1870 = vpack.c.b16 %v1308, %v1306
    %v1871 = vpack.c.b16 %v1311, %v1309
    %v1872 = vpack.c.b16 %v1312, %v1310
    %v1873 = vpack.c.b16 %v1315, %v1313
    %v1874 = vpack.c.b16 %v1316, %v1314
    %v1875 = vpack.c.b16 %v1319, %v1317
    %v1876 = vpack.c.b16 %v1320, %v1318
    %v1877 = vpack.c.b16 %v1323, %v1321
    %v1878 = vpack.c.b16 %v1324, %v1322
    %v1879 = vpack.c.b16 %v1327, %v1325
    %v1880 = vpack.c.b16 %v1328, %v1326
    %v1881 = vpack.c.b16 %v1331, %v1329
    %v1882 = vpack.c.b16 %v1332, %v1330
    %v1883 = vpack.c.b16 %v1335, %v1333
    %v1884 = vpack.c.b16 %v1336, %v1334
    %v1885 = vpack.c.b16 %v1339, %v1337
    %v1886 = vpack.c.b16 %v1340, %v1338
    %v1887 = vpack.c.b16 %v1343, %v1341
    %v1888 = vpack.c.b16 %v1344, %v1342
    %v1889 = vpack.c.b16 %v1347, %v1345
    %v1890 = vpack.c.b16 %v1348, %v1346
    %v1891 = vpack.c.b16 %v1351, %v1349
    %v1892 = vpack.c.b16 %v1352, %v1350
    %v1893 = vpack.c.b16 %v1355, %v1353
    %v1894 = vpack.c.b16 %v1356, %v1354
    %v1895 = vpack.c.b16 %v1359, %v1357
    %v1896 = vpack.c.b16 %v1360, %v1358
    %v1897 = vpack.c.b16 %v1363, %v1361
    %v1898 = vpack.c.b16 %v1364, %v1362
    %v1899 = vpack.c.b16 %v1367, %v1365
    %v1900 = vpack.c.b16 %v1368, %v1366
    %v1901 = vpack.c.b16 %v1371, %v1369
    %v1902 = vpack.c.b16 %v1372, %v1370
    %v1903 = vpack.c.b16 %v1375, %v1373
    %v1904 = vpack.c.b16 %v1376, %v1374
    %v1905 = vpack.c.b16 %v1379, %v1377
    %v1906 = vpack.c.b16 %v1380, %v1378
    %v1907 = vpack.c.b16 %v1383, %v1381
    %v1908 = vpack.c.b16 %v1384, %v1382
    %v1909 = vpack.c.b16 %v1387, %v1385
    %v1910 = vpack.c.b16 %v1388, %v1386
    %v1911 = vpack.c.b16 %v1391, %v1389
    %v1912 = vpack.c.b16 %v1392, %v1390
    %v1913 = vpack.c.b16 %v1395, %v1393
    %v1914 = vpack.c.b16 %v1396, %v1394
    %v1915 = vpack.c.b16 %v1399, %v1397
    %v1916 = vpack.c.b16 %v1400, %v1398
    %v1917 = vpack.c.b16 %v1403, %v1401
    %v1918 = vpack.c.b16 %v1404, %v1402
    %v1919 = vpack.c.b16 %v1407, %v1405
    %v1920 = vpack.c.b16 %v1408, %v1406
    %v1921 = vpack.c.b16 %v1411, %v1409
    %v1922 = vpack.c.b16 %v1412, %v1410
    %v1923 = vpack.c.b16 %v1415, %v1413
    %v1924 = vpack.c.b16 %v1416, %v1414
    %v1925 = vpack.c.b16 %v1419, %v1417
    %v1926 = vpack.c.b16 %v1420, %v1418
    %v1927 = vpack.c.b16 %v1423, %v1421
    %v1928 = vpack.c.b16 %v1424, %v1422
    %v1929 = vpack.c.b16 %v1427, %v1425
    %v1930 = vpack.c.b16 %v1428, %v1426
    %v1931 = vpack.c.b16 %v1431, %v1429
    %v1932 = vpack.c.b16 %v1432, %v1430
    %v1933 = vpack.c.b16 %v1435, %v1433
    %v1934 = vpack.c.b16 %v1436, %v1434
    %v1935 = vpack.c.b16 %v1439, %v1437
    %v1936 = vpack.c.b16 %v1440, %v1438
    %v1937 = vpack.c.b16 %v1443, %v1441
    %v1938 = vpack.c.b16 %v1444, %v1442
    %v1939 = vpack.c.b16 %v1447, %v1445
    %v1940 = vpack.c.b16 %v1448, %v1446
    %v1941 = vpack.c.b16 %v1451, %v1449
    %v1942 = vpack.c.b16 %v1452, %v1450
    %v1943 = vpack.c.b16 %v1455, %v1453
    %v1944 = vpack.c.b16 %v1456, %v1454
    %v1945 = vpack.c.b16 %v1459, %v1457
    %v1946 = vpack.c.b16 %v1460, %v1458
    %v1947 = vpack.c.b16 %v1463, %v1461
    %v1948 = vpack.c.b16 %v1464, %v1462
    %v1949 = vpack.c.b16 %v1467, %v1465
    %v1950 = vpack.c.b16 %v1468, %v1466
    %v1951 = vpack.c.b16 %v1471, %v1469
    %v1952 = vpack.c.b16 %v1472, %v1470
    %v1953 = vpack.c.b16 %v1475, %v1473
    %v1954 = vpack.c.b16 %v1476, %v1474
    %v1955 = vpack.c.b16 %v1479, %v1477
    %v1956 = vpack.c.b16 %v1480, %v1478
    %v1957 = vpack.c.b16 %v1483, %v1481
    %v1958 = vpack.c.b16 %v1484, %v1482
    %v1959 = vpack.c.b16 %v1487, %v1485
    %v1960 = vpack.c.b16 %v1488, %v1486
    %v1961 = vpack.c.b16 %v1491, %v1489
    %v1962 = vpack.c.b16 %v1492, %v1490
    %v1963 = vpack.c.b16 %v1495, %v1493
    %v1964 = vpack.c.b16 %v1496, %v1494
    %v1965 = vpack.c.b16 %v1499, %v1497
    %v1966 = vpack.c.b16 %v1500, %v1498
    %v1967 = vpack.c.b16 %v1503, %v1501
    %v1968 = vpack.c.b16 %v1504, %v1502
    %v1969 = vpack.c.b16 %v1507, %v1505
    %v1970 = vpack.c.b16 %v1508, %v1506
    %v1971 = vpack.c.b16 %v1511, %v1509
    %v1972 = vpack.c.b16 %v1512, %v1510
    %v1973 = vpack.c.b16 %v1515, %v1513
    %v1974 = vpack.c.b16 %v1516, %v1514
    %v1975 = vpack.c.b16 %v1519, %v1517
    %v1976 = vpack.c.b16 %v1520, %v1518
    %v1977 = vpack.c.b16 %v1523, %v1521
    %v1978 = vpack.c.b16 %v1524, %v1522
    %v1979 = vpack.c.b16 %v1527, %v1525
    %v1980 = vpack.c.b16 %v1528, %v1526
    %v1981 = vpack.c.b16 %v1531, %v1529
    %v1982 = vpack.c.b16 %v1532, %v1530
    %v1983 = vpack.c.b16 %v1535, %v1533
    %v1984 = vpack.c.b16 %v1536, %v1534
    %v1985 = vpack.c.b16 %v1539, %v1537
    %v1986 = vpack.c.b16 %v1540, %v1538
    %v1987 = vpack.c.b16 %v1543, %v1541
    %v1988 = vpack.c.b16 %v1544, %v1542
    %v1989 = vpack.c.b16 %v1547, %v1545
    %v1990 = vpack.c.b16 %v1548, %v1546
    %v1991 = vpack.c.b16 %v1551, %v1549
    %v1992 = vpack.c.b16 %v1552, %v1550
    %v1993 = vpack.c.b16 %v1555, %v1553
    %v1994 = vpack.c.b16 %v1556, %v1554
    %v1995 = vpack.c.b16 %v1559, %v1557
    %v1996 = vpack.c.b16 %v1560, %v1558
    %v1997 = vpack.c.b16 %v1563, %v1561
    %v1998 = vpack.c.b16 %v1564, %v1562
    %v1999 = vpack.c.b16 %v1567, %v1565
    %v2000 = vpack.c.b16 %v1568, %v1566
    %v2001 = vpack.c.b16 %v1571, %v1569
    %v2002 = vpack.c.b16 %v1572, %v1570
    %v2003 = vpack.c.b16 %v1575, %v1573
    %v2004 = vpack.c.b16 %v1576, %v1574
    %v2005 = vpack.c.b16 %v1579, %v1577
    %v2006 = vpack.c.b16 %v1580, %v1578
    %v2007 = vpack.c.b16 %v1583, %v1581
    %v2008 = vpack.c.b16 %v1584, %v1582
    %v2009 = vpack.c.b16 %v1587, %v1585
    %v2010 = vpack.c.b16 %v1588, %v1586
    %v2011 = vpack.c.b16 %v1591, %v1589
    %v2012 = vpack.c.b16 %v1592, %v1590
    %v2013 = vpack.c.b16 %v1595, %v1593
    %v2014 = vpack.c.b16 %v1596, %v1594
    %v2015 = vpack.c.b16 %v1599, %v1597
    %v2016 = vpack.c.b16 %v1600, %v1598
    %v2017 = vpack.c.b16 %v1603, %v1601
    %v2018 = vpack.c.b16 %v1604, %v1602
    %v2019 = vpack.c.b16 %v1607, %v1605
    %v2020 = vpack.c.b16 %v1608, %v1606
    %v2021 = vpack.c.b16 %v1611, %v1609
    %v2022 = vpack.c.b16 %v1612, %v1610
    %v2023 = vpack.c.b16 %v1615, %v1613
    %v2024 = vpack.c.b16 %v1616, %v1614
    %v2025 = vpack.c.b16 %v1619, %v1617
    %v2026 = vpack.c.b16 %v1620, %v1618
    %v2027 = vpack.c.b16 %v1623, %v1621
    %v2028 = vpack.c.b16 %v1624, %v1622
    %v2029 = vpack.c.b16 %v1627, %v1625
    %v2030 = vpack.c.b16 %v1628, %v1626
    %v2031 = vpack.c.b16 %v1631, %v1629
    %v2032 = vpack.c.b16 %v1632, %v1630
    %v2033 = vpack.c.b16 %v1635, %v1633
    %v2034 = vpack.c.b16 %v1636, %v1634
    %v2035 = vpack.c.b16 %v1639, %v1637
    %v2036 = vpack.c.b16 %v1640, %v1638
    %v2037 = vpack.c.b16 %v1643, %v1641
    %v2038 = vpack.c.b16 %v1644, %v1642
    %v2039 = vpack.c.b16 %v1647, %v1645
    %v2040 = vpack.c.b16 %v1648, %v1646
    %v2041 = vpack.c.b16 %v1651, %v1649
    %v2042 = vpack.c.b16 %v1652, %v1650
    %v2043 = vpack.c.b16 %v1655, %v1653
    %v2044 = vpack.c.b16 %v1656, %v1654
    %v2045 = vpack.c.b16 %v1659, %v1657
    %v2046 = vpack.c.b16 %v1660, %v1658
    %v2047 = vpack.c.b16 %v1663, %v1661
    %v2048 = vpack.c.b16 %v1664, %v1662
    %v2049 = vpack.c.b16 %v1667, %v1665
    %v2050 = vpack.c.b16 %v1668, %v1666
    %v2051 = vpack.c.b16 %v1671, %v1669
    %v2052 = vpack.c.b16 %v1672, %v1670
    %v2053 = vpack.c.b16 %v1675, %v1673
    %v2054 = vpack.c.b16 %v1676, %v1674
    %v2055 = vpack.c.b16 %v1679, %v1677
    %v2056 = vpack.c.b16 %v1680, %v1678
    %v2057 = vpack.c.b16 %v1683, %v1681
    %v2058 = vpack.c.b16 %v1684, %v1682
    %v2059 = vpack.c.b16 %v1687, %v1685
    %v2060 = vpack.c.b16 %v1688, %v1686
    %v2061 = vpack.c.b16 %v1691, %v1689
    %v2062 = vpack.c.b16 %v1692, %v1690
    %v2063 = vpack.c.b16 %v1695, %v1693
    %v2064 = vpack.c.b16 %v1696, %v1694
    %2433 = vmatprep.subr.bf16.mxu0 %v1698
    %2434 = vmatpush1.bf16.msra.mxu0 %v1697
    %2435 = vmatprep.subr.bf16.mxu0 %v1700
    %2436 = vmatpush1.bf16.msra.mxu0 %v1699
    %2437 = vmatprep.subr.bf16.mxu0 %v1702
    %2438 = vmatpush1.bf16.msra.mxu0 %v1701
    %2439 = vmatprep.subr.bf16.mxu0 %v1704
    %2440 = vmatpush1.bf16.msra.mxu0 %v1703
    %2441 = vmatprep.subr.bf16.mxu0 %v1706
    %2442 = vmatpush1.bf16.msra.mxu0 %v1705
    %2443 = vmatprep.subr.bf16.mxu0 %v1708
    %2444 = vmatpush1.bf16.msra.mxu0 %v1707
    %2445 = vmatprep.subr.bf16.mxu0 %v1710
    %2446 = vmatpush1.bf16.msra.mxu0 %v1709
    %2447 = vmatprep.subr.bf16.mxu0 %v1712
    %2448 = vmatpush1.bf16.msra.mxu0 %v1711
    %2449 = vmatprep.subr.bf16.mxu0 %v1714
    %2450 = vmatpush1.bf16.msra.mxu0 %v1713
    %2451 = vmatprep.subr.bf16.mxu0 %v1716
    %2452 = vmatpush1.bf16.msra.mxu0 %v1715
    %2453 = vmatprep.subr.bf16.mxu0 %v1718
    %2454 = vmatpush1.bf16.msra.mxu0 %v1717
    %2455 = vmatprep.subr.bf16.mxu0 %v1720
    %2456 = vmatpush1.bf16.msra.mxu0 %v1719
    %2457 = vmatprep.subr.bf16.mxu0 %v1722
    %2458 = vmatpush1.bf16.msra.mxu0 %v1721
    %2459 = vmatprep.subr.bf16.mxu0 %v1724
    %2460 = vmatpush1.bf16.msra.mxu0 %v1723
    %2461 = vmatprep.subr.bf16.mxu0 %v1726
    %2462 = vmatpush1.bf16.msra.mxu0 %v1725
    %2463 = vmatprep.subr.bf16.mxu0 %v1728
    %2464 = vmatpush1.bf16.msra.mxu0 %v1727
    %2465 = vmatprep.mubr.bf16.mxu0 %v548
    %2466 = vmatmul.mubr.bf16.gmra.mrb[0].mxu0 %v547
    %v2467 = vpop.f32.mrb[0].mxu0
    %v2468 = vadd.f32 %v505, %v2467
    %v2469 = vpop.f32.mrb[0].mxu0
    %v2470 = vadd.f32 %v509, %v2469
    %v2471 = vpop.f32.mrb[0].mxu0
    %v2472 = vpop.f32.mrb[0].mxu0
    %2473 = vdwg.mxu0
    %2474 = vmatprep.subr.bf16.mxu0 %v1730
    %2475 = vmatpush1.bf16.msra.mxu0 %v1729
    %2476 = vmatprep.subr.bf16.mxu0 %v1732
    %2477 = vmatpush1.bf16.msra.mxu0 %v1731
    %2478 = vmatprep.subr.bf16.mxu0 %v1734
    %2479 = vmatpush1.bf16.msra.mxu0 %v1733
    %2480 = vmatprep.subr.bf16.mxu0 %v1736
    %2481 = vmatpush1.bf16.msra.mxu0 %v1735
    %2482 = vmatprep.subr.bf16.mxu0 %v1738
    %2483 = vmatpush1.bf16.msra.mxu0 %v1737
    %2484 = vmatprep.subr.bf16.mxu0 %v1740
    %2485 = vmatpush1.bf16.msra.mxu0 %v1739
    %2486 = vmatprep.subr.bf16.mxu0 %v1742
    %2487 = vmatpush1.bf16.msra.mxu0 %v1741
    %2488 = vmatprep.subr.bf16.mxu0 %v1744
    %2489 = vmatpush1.bf16.msra.mxu0 %v1743
    %2490 = vmatprep.subr.bf16.mxu0 %v1746
    %2491 = vmatpush1.bf16.msra.mxu0 %v1745
    %2492 = vmatprep.subr.bf16.mxu0 %v1748
    %2493 = vmatpush1.bf16.msra.mxu0 %v1747
    %2494 = vmatprep.subr.bf16.mxu0 %v1750
    %2495 = vmatpush1.bf16.msra.mxu0 %v1749
    %2496 = vmatprep.subr.bf16.mxu0 %v1752
    %2497 = vmatpush1.bf16.msra.mxu0 %v1751
    %2498 = vmatprep.subr.bf16.mxu0 %v1754
    %2499 = vmatpush1.bf16.msra.mxu0 %v1753
    %2500 = vmatprep.subr.bf16.mxu0 %v1756
    %2501 = vmatpush1.bf16.msra.mxu0 %v1755
    %2502 = vmatprep.subr.bf16.mxu0 %v1758
    %2503 = vmatpush1.bf16.msra.mxu0 %v1757
    %2504 = vmatprep.subr.bf16.mxu0 %v1760
    %2505 = vmatpush1.bf16.msra.mxu0 %v1759
    %2506 = vmatprep.mubr.bf16.mxu0 %v550
    %2507 = vmatmul.mubr.bf16.gmra.mrb[0].mxu0 %v549
    %v2508 = vpop.f32.mrb[0].mxu0
    %v2509 = vadd.f32 %v2468, %v2508
    %v2510 = vpop.f32.mrb[0].mxu0
    %v2511 = vadd.f32 %v2470, %v2510
    %v2512 = vpop.f32.mrb[0].mxu0
    %v2513 = vpop.f32.mrb[0].mxu0
    %2514 = vdwg.mxu0
    %2515 = vmatprep.subr.bf16.mxu0 %v1762
    %2516 = vmatpush1.bf16.msra.mxu0 %v1761
    %2517 = vmatprep.subr.bf16.mxu0 %v1764
    %2518 = vmatpush1.bf16.msra.mxu0 %v1763
    %2519 = vmatprep.subr.bf16.mxu0 %v1766
    %2520 = vmatpush1.bf16.msra.mxu0 %v1765
    %2521 = vmatprep.subr.bf16.mxu0 %v1768
    %2522 = vmatpush1.bf16.msra.mxu0 %v1767
    %2523 = vmatprep.subr.bf16.mxu0 %v1770
    %2524 = vmatpush1.bf16.msra.mxu0 %v1769
    %2525 = vmatprep.subr.bf16.mxu0 %v1772
    %2526 = vmatpush1.bf16.msra.mxu0 %v1771
    %2527 = vmatprep.subr.bf16.mxu0 %v1774
    %2528 = vmatpush1.bf16.msra.mxu0 %v1773
    %2529 = vmatprep.subr.bf16.mxu0 %v1776
    %2530 = vmatpush1.bf16.msra.mxu0 %v1775
    %2531 = vmatprep.subr.bf16.mxu0 %v1778
    %2532 = vmatpush1.bf16.msra.mxu0 %v1777
    %2533 = vmatprep.subr.bf16.mxu0 %v1780
    %2534 = vmatpush1.bf16.msra.mxu0 %v1779
    %2535 = vmatprep.subr.bf16.mxu0 %v1782
    %2536 = vmatpush1.bf16.msra.mxu0 %v1781
    %2537 = vmatprep.subr.bf16.mxu0 %v1784
    %2538 = vmatpush1.bf16.msra.mxu0 %v1783
    %2539 = vmatprep.subr.bf16.mxu0 %v1786
    %2540 = vmatpush1.bf16.msra.mxu0 %v1785
    %2541 = vmatprep.subr.bf16.mxu0 %v1788
    %2542 = vmatpush1.bf16.msra.mxu0 %v1787
    %2543 = vmatprep.subr.bf16.mxu0 %v1790
    %2544 = vmatpush1.bf16.msra.mxu0 %v1789
    %2545 = vmatprep.subr.bf16.mxu0 %v1792
    %2546 = vmatpush1.bf16.msra.mxu0 %v1791
    %2547 = vmatprep.mubr.bf16.mxu0 %v552
    %2548 = vmatmul.mubr.bf16.gmra.mrb[0].mxu0 %v551
    %v2549 = vpop.f32.mrb[0].mxu0
    %v2550 = vadd.f32 %v2509, %v2549
    %v2551 = vpop.f32.mrb[0].mxu0
    %v2552 = vadd.f32 %v2511, %v2551
    %v2553 = vpop.f32.mrb[0].mxu0
    %v2554 = vpop.f32.mrb[0].mxu0
    %2555 = vdwg.mxu0
    %2556 = vmatprep.subr.bf16.mxu0 %v1794
    %2557 = vmatpush1.bf16.msra.mxu0 %v1793
    %2558 = vmatprep.subr.bf16.mxu0 %v1796
    %2559 = vmatpush1.bf16.msra.mxu0 %v1795
    %2560 = vmatprep.subr.bf16.mxu0 %v1798
    %2561 = vmatpush1.bf16.msra.mxu0 %v1797
    %2562 = vmatprep.subr.bf16.mxu0 %v1800
    %2563 = vmatpush1.bf16.msra.mxu0 %v1799
    %2564 = vmatprep.subr.bf16.mxu0 %v1802
    %2565 = vmatpush1.bf16.msra.mxu0 %v1801
    %2566 = vmatprep.subr.bf16.mxu0 %v1804
    %2567 = vmatpush1.bf16.msra.mxu0 %v1803
    %2568 = vmatprep.subr.bf16.mxu0 %v1806
    %2569 = vmatpush1.bf16.msra.mxu0 %v1805
    %2570 = vmatprep.subr.bf16.mxu0 %v1808
    %2571 = vmatpush1.bf16.msra.mxu0 %v1807
    %2572 = vmatprep.subr.bf16.mxu0 %v1810
    %2573 = vmatpush1.bf16.msra.mxu0 %v1809
    %2574 = vmatprep.subr.bf16.mxu0 %v1812
    %2575 = vmatpush1.bf16.msra.mxu0 %v1811
    %2576 = vmatprep.subr.bf16.mxu0 %v1814
    %2577 = vmatpush1.bf16.msra.mxu0 %v1813
    %2578 = vmatprep.subr.bf16.mxu0 %v1816
    %2579 = vmatpush1.bf16.msra.mxu0 %v1815
    %2580 = vmatprep.subr.bf16.mxu0 %v1818
    %2581 = vmatpush1.bf16.msra.mxu0 %v1817
    %2582 = vmatprep.subr.bf16.mxu0 %v1820
    %2583 = vmatpush1.bf16.msra.mxu0 %v1819
    %2584 = vmatprep.subr.bf16.mxu0 %v1822
    %2585 = vmatpush1.bf16.msra.mxu0 %v1821
    %2586 = vmatprep.subr.bf16.mxu0 %v1824
    %2587 = vmatpush1.bf16.msra.mxu0 %v1823
    %2588 = vmatprep.mubr.bf16.mxu0 %v554
    %2589 = vmatmul.mubr.bf16.gmra.mrb[0].mxu0 %v553
    %v2590 = vpop.f32.mrb[0].mxu0
    %v2591 = vadd.f32 %v2550, %v2590
    %v2592 = vpop.f32.mrb[0].mxu0
    %v2593 = vadd.f32 %v2552, %v2592
    %v2594 = vpop.f32.mrb[0].mxu0
    %v2595 = vpop.f32.mrb[0].mxu0
    %2596 = vdwg.mxu0
    %2597 = vmatprep.subr.bf16.mxu0 %v1826
    %2598 = vmatpush1.bf16.msra.mxu0 %v1825
    %2599 = vmatprep.subr.bf16.mxu0 %v1828
    %2600 = vmatpush1.bf16.msra.mxu0 %v1827
    %2601 = vmatprep.subr.bf16.mxu0 %v1830
    %2602 = vmatpush1.bf16.msra.mxu0 %v1829
    %2603 = vmatprep.subr.bf16.mxu0 %v1832
    %2604 = vmatpush1.bf16.msra.mxu0 %v1831
    %2605 = vmatprep.subr.bf16.mxu0 %v1834
    %2606 = vmatpush1.bf16.msra.mxu0 %v1833
    %2607 = vmatprep.subr.bf16.mxu0 %v1836
    %2608 = vmatpush1.bf16.msra.mxu0 %v1835
    %2609 = vmatprep.subr.bf16.mxu0 %v1838
    %2610 = vmatpush1.bf16.msra.mxu0 %v1837
    %2611 = vmatprep.subr.bf16.mxu0 %v1840
    %2612 = vmatpush1.bf16.msra.mxu0 %v1839
    %2613 = vmatprep.subr.bf16.mxu0 %v1842
    %2614 = vmatpush1.bf16.msra.mxu0 %v1841
    %2615 = vmatprep.subr.bf16.mxu0 %v1844
    %2616 = vmatpush1.bf16.msra.mxu0 %v1843
    %2617 = vmatprep.subr.bf16.mxu0 %v1846
    %2618 = vmatpush1.bf16.msra.mxu0 %v1845
    %2619 = vmatprep.subr.bf16.mxu0 %v1848
    %2620 = vmatpush1.bf16.msra.mxu0 %v1847
    %2621 = vmatprep.subr.bf16.mxu0 %v1850
    %2622 = vmatpush1.bf16.msra.mxu0 %v1849
    %2623 = vmatprep.subr.bf16.mxu0 %v1852
    %2624 = vmatpush1.bf16.msra.mxu0 %v1851
    %2625 = vmatprep.subr.bf16.mxu0 %v1854
    %2626 = vmatpush1.bf16.msra.mxu0 %v1853
    %2627 = vmatprep.subr.bf16.mxu0 %v1856
    %2628 = vmatpush1.bf16.msra.mxu0 %v1855
    %2629 = vmatprep.mubr.bf16.mxu0 %v556
    %2630 = vmatmul.mubr.bf16.gmra.mrb[0].mxu0 %v555
    %v2631 = vpop.f32.mrb[0].mxu0
    %v2632 = vadd.f32 %v2591, %v2631
    %v2633 = vpop.f32.mrb[0].mxu0
    %v2634 = vadd.f32 %v2593, %v2633
    %v2635 = vpop.f32.mrb[0].mxu0
    %v2636 = vpop.f32.mrb[0].mxu0
    %2637 = vdwg.mxu0
    %2638 = vmatprep.subr.bf16.mxu0 %v1858
    %2639 = vmatpush1.bf16.msra.mxu0 %v1857
    %2640 = vmatprep.subr.bf16.mxu0 %v1860
    %2641 = vmatpush1.bf16.msra.mxu0 %v1859
    %2642 = vmatprep.subr.bf16.mxu0 %v1862
    %2643 = vmatpush1.bf16.msra.mxu0 %v1861
    %2644 = vmatprep.subr.bf16.mxu0 %v1864
    %2645 = vmatpush1.bf16.msra.mxu0 %v1863
    %2646 = vmatprep.subr.bf16.mxu0 %v1866
    %2647 = vmatpush1.bf16.msra.mxu0 %v1865
    %2648 = vmatprep.subr.bf16.mxu0 %v1868
    %2649 = vmatpush1.bf16.msra.mxu0 %v1867
    %2650 = vmatprep.subr.bf16.mxu0 %v1870
    %2651 = vmatpush1.bf16.msra.mxu0 %v1869
    %2652 = vmatprep.subr.bf16.mxu0 %v1872
    %2653 = vmatpush1.bf16.msra.mxu0 %v1871
    %2654 = vmatprep.subr.bf16.mxu0 %v1874
    %2655 = vmatpush1.bf16.msra.mxu0 %v1873
    %2656 = vmatprep.subr.bf16.mxu0 %v1876
    %2657 = vmatpush1.bf16.msra.mxu0 %v1875
    %2658 = vmatprep.subr.bf16.mxu0 %v1878
    %2659 = vmatpush1.bf16.msra.mxu0 %v1877
    %2660 = vmatprep.subr.bf16.mxu0 %v1880
    %2661 = vmatpush1.bf16.msra.mxu0 %v1879
    %2662 = vmatprep.subr.bf16.mxu0 %v1882
    %2663 = vmatpush1.bf16.msra.mxu0 %v1881
    %2664 = vmatprep.subr.bf16.mxu0 %v1884
    %2665 = vmatpush1.bf16.msra.mxu0 %v1883
    %2666 = vmatprep.subr.bf16.mxu0 %v1886
    %2667 = vmatpush1.bf16.msra.mxu0 %v1885
    %2668 = vmatprep.subr.bf16.mxu0 %v1888
    %2669 = vmatpush1.bf16.msra.mxu0 %v1887
    %2670 = vmatprep.mubr.bf16.mxu0 %v558
    %2671 = vmatmul.mubr.bf16.gmra.mrb[0].mxu0 %v557
    %v2672 = vpop.f32.mrb[0].mxu0
    %v2673 = vadd.f32 %v2632, %v2672
    %v2674 = vpop.f32.mrb[0].mxu0
    %v2675 = vadd.f32 %v2634, %v2674
    %v2676 = vpop.f32.mrb[0].mxu0
    %v2677 = vpop.f32.mrb[0].mxu0
    %2678 = vdwg.mxu0
    %2679 = vmatprep.subr.bf16.mxu0 %v1890
    %2680 = vmatpush1.bf16.msra.mxu0 %v1889
    %2681 = vmatprep.subr.bf16.mxu0 %v1892
    %2682 = vmatpush1.bf16.msra.mxu0 %v1891
    %2683 = vmatprep.subr.bf16.mxu0 %v1894
    %2684 = vmatpush1.bf16.msra.mxu0 %v1893
    %2685 = vmatprep.subr.bf16.mxu0 %v1896
    %2686 = vmatpush1.bf16.msra.mxu0 %v1895
    %2687 = vmatprep.subr.bf16.mxu0 %v1898
    %2688 = vmatpush1.bf16.msra.mxu0 %v1897
    %2689 = vmatprep.subr.bf16.mxu0 %v1900
    %2690 = vmatpush1.bf16.msra.mxu0 %v1899
    %2691 = vmatprep.subr.bf16.mxu0 %v1902
    %2692 = vmatpush1.bf16.msra.mxu0 %v1901
    %2693 = vmatprep.subr.bf16.mxu0 %v1904
    %2694 = vmatpush1.bf16.msra.mxu0 %v1903
    %2695 = vmatprep.subr.bf16.mxu0 %v1906
    %2696 = vmatpush1.bf16.msra.mxu0 %v1905
    %2697 = vmatprep.subr.bf16.mxu0 %v1908
    %2698 = vmatpush1.bf16.msra.mxu0 %v1907
    %2699 = vmatprep.subr.bf16.mxu0 %v1910
    %2700 = vmatpush1.bf16.msra.mxu0 %v1909
    %2701 = vmatprep.subr.bf16.mxu0 %v1912
    %2702 = vmatpush1.bf16.msra.mxu0 %v1911
    %2703 = vmatprep.subr.bf16.mxu0 %v1914
    %2704 = vmatpush1.bf16.msra.mxu0 %v1913
    %2705 = vmatprep.subr.bf16.mxu0 %v1916
    %2706 = vmatpush1.bf16.msra.mxu0 %v1915
    %2707 = vmatprep.subr.bf16.mxu0 %v1918
    %2708 = vmatpush1.bf16.msra.mxu0 %v1917
    %2709 = vmatprep.subr.bf16.mxu0 %v1920
    %2710 = vmatpush1.bf16.msra.mxu0 %v1919
    %2711 = vmatprep.mubr.bf16.mxu0 %v560
    %2712 = vmatmul.mubr.bf16.gmra.mrb[0].mxu0 %v559
    %v2713 = vpop.f32.mrb[0].mxu0
    %v2714 = vadd.f32 %v2673, %v2713
    %v2715 = vpop.f32.mrb[0].mxu0
    %v2716 = vadd.f32 %v2675, %v2715
    %v2717 = vpop.f32.mrb[0].mxu0
    %v2718 = vpop.f32.mrb[0].mxu0
    %2719 = vdwg.mxu0
    %2720 = vmatprep.subr.bf16.mxu0 %v1922
    %2721 = vmatpush1.bf16.msra.mxu0 %v1921
    %2722 = vmatprep.subr.bf16.mxu0 %v1924
    %2723 = vmatpush1.bf16.msra.mxu0 %v1923
    %2724 = vmatprep.subr.bf16.mxu0 %v1926
    %2725 = vmatpush1.bf16.msra.mxu0 %v1925
    %2726 = vmatprep.subr.bf16.mxu0 %v1928
    %2727 = vmatpush1.bf16.msra.mxu0 %v1927
    %2728 = vmatprep.subr.bf16.mxu0 %v1930
    %2729 = vmatpush1.bf16.msra.mxu0 %v1929
    %2730 = vmatprep.subr.bf16.mxu0 %v1932
    %2731 = vmatpush1.bf16.msra.mxu0 %v1931
    %2732 = vmatprep.subr.bf16.mxu0 %v1934
    %2733 = vmatpush1.bf16.msra.mxu0 %v1933
    %2734 = vmatprep.subr.bf16.mxu0 %v1936
    %2735 = vmatpush1.bf16.msra.mxu0 %v1935
    %2736 = vmatprep.subr.bf16.mxu0 %v1938
    %2737 = vmatpush1.bf16.msra.mxu0 %v1937
    %2738 = vmatprep.subr.bf16.mxu0 %v1940
    %2739 = vmatpush1.bf16.msra.mxu0 %v1939
    %2740 = vmatprep.subr.bf16.mxu0 %v1942
    %2741 = vmatpush1.bf16.msra.mxu0 %v1941
    %2742 = vmatprep.subr.bf16.mxu0 %v1944
    %2743 = vmatpush1.bf16.msra.mxu0 %v1943
    %2744 = vmatprep.subr.bf16.mxu0 %v1946
    %2745 = vmatpush1.bf16.msra.mxu0 %v1945
    %2746 = vmatprep.subr.bf16.mxu0 %v1948
    %2747 = vmatpush1.bf16.msra.mxu0 %v1947
    %2748 = vmatprep.subr.bf16.mxu0 %v1950
    %2749 = vmatpush1.bf16.msra.mxu0 %v1949
    %2750 = vmatprep.subr.bf16.mxu0 %v1952
    %2751 = vmatpush1.bf16.msra.mxu0 %v1951
    %2752 = vmatprep.mubr.bf16.mxu0 %v562
    %2753 = vmatmul.mubr.bf16.gmra.mrb[0].mxu0 %v561
    %v2754 = vpop.f32.mrb[0].mxu0
    %v2755 = vadd.f32 %v2714, %v2754
    %v2756 = vpop.f32.mrb[0].mxu0
    %v2757 = vadd.f32 %v2716, %v2756
    %v2758 = vpop.f32.mrb[0].mxu0
    %v2759 = vpop.f32.mrb[0].mxu0
    %2760 = vdwg.mxu0
    %2761 = vmatprep.subr.bf16.mxu0 %v1954
    %2762 = vmatpush1.bf16.msra.mxu0 %v1953
    %2763 = vmatprep.subr.bf16.mxu0 %v1956
    %2764 = vmatpush1.bf16.msra.mxu0 %v1955
    %2765 = vmatprep.subr.bf16.mxu0 %v1958
    %2766 = vmatpush1.bf16.msra.mxu0 %v1957
    %2767 = vmatprep.subr.bf16.mxu0 %v1960
    %2768 = vmatpush1.bf16.msra.mxu0 %v1959
    %2769 = vmatprep.subr.bf16.mxu0 %v1962
    %2770 = vmatpush1.bf16.msra.mxu0 %v1961
    %2771 = vmatprep.subr.bf16.mxu0 %v1964
    %2772 = vmatpush1.bf16.msra.mxu0 %v1963
    %2773 = vmatprep.subr.bf16.mxu0 %v1966
    %2774 = vmatpush1.bf16.msra.mxu0 %v1965
    %2775 = vmatprep.subr.bf16.mxu0 %v1968
    %2776 = vmatpush1.bf16.msra.mxu0 %v1967
    %2777 = vmatprep.subr.bf16.mxu0 %v1970
    %2778 = vmatpush1.bf16.msra.mxu0 %v1969
    %2779 = vmatprep.subr.bf16.mxu0 %v1972
    %2780 = vmatpush1.bf16.msra.mxu0 %v1971
    %2781 = vmatprep.subr.bf16.mxu0 %v1974
    %2782 = vmatpush1.bf16.msra.mxu0 %v1973
    %2783 = vmatprep.subr.bf16.mxu0 %v1976
    %2784 = vmatpush1.bf16.msra.mxu0 %v1975
    %2785 = vmatprep.subr.bf16.mxu0 %v1978
    %2786 = vmatpush1.bf16.msra.mxu0 %v1977
    %2787 = vmatprep.subr.bf16.mxu0 %v1980
    %2788 = vmatpush1.bf16.msra.mxu0 %v1979
    %2789 = vmatprep.subr.bf16.mxu0 %v1982
    %2790 = vmatpush1.bf16.msra.mxu0 %v1981
    %2791 = vmatprep.subr.bf16.mxu0 %v1984
    %2792 = vmatpush1.bf16.msra.mxu0 %v1983
    %2793 = vmatprep.mubr.bf16.mxu0 %v564
    %2794 = vmatmul.mubr.bf16.gmra.mrb[0].mxu0 %v563
    %v2795 = vpop.f32.mrb[0].mxu0
    %v2796 = vadd.f32 %v2755, %v2795
    %v2797 = vpop.f32.mrb[0].mxu0
    %v2798 = vadd.f32 %v2757, %v2797
    %v2799 = vpop.f32.mrb[0].mxu0
    %v2800 = vpop.f32.mrb[0].mxu0
    %2801 = vdwg.mxu0
    %2802 = vmatprep.subr.bf16.mxu0 %v1986
    %2803 = vmatpush1.bf16.msra.mxu0 %v1985
    %2804 = vmatprep.subr.bf16.mxu0 %v1988
    %2805 = vmatpush1.bf16.msra.mxu0 %v1987
    %2806 = vmatprep.subr.bf16.mxu0 %v1990
    %2807 = vmatpush1.bf16.msra.mxu0 %v1989
    %2808 = vmatprep.subr.bf16.mxu0 %v1992
    %2809 = vmatpush1.bf16.msra.mxu0 %v1991
    %2810 = vmatprep.subr.bf16.mxu0 %v1994
    %2811 = vmatpush1.bf16.msra.mxu0 %v1993
    %2812 = vmatprep.subr.bf16.mxu0 %v1996
    %2813 = vmatpush1.bf16.msra.mxu0 %v1995
    %2814 = vmatprep.subr.bf16.mxu0 %v1998
    %2815 = vmatpush1.bf16.msra.mxu0 %v1997
    %2816 = vmatprep.subr.bf16.mxu0 %v2000
    %2817 = vmatpush1.bf16.msra.mxu0 %v1999
    %2818 = vmatprep.subr.bf16.mxu0 %v2002
    %2819 = vmatpush1.bf16.msra.mxu0 %v2001
    %2820 = vmatprep.subr.bf16.mxu0 %v2004
    %2821 = vmatpush1.bf16.msra.mxu0 %v2003
    %2822 = vmatprep.subr.bf16.mxu0 %v2006
    %2823 = vmatpush1.bf16.msra.mxu0 %v2005
    %2824 = vmatprep.subr.bf16.mxu0 %v2008
    %2825 = vmatpush1.bf16.msra.mxu0 %v2007
    %2826 = vmatprep.subr.bf16.mxu0 %v2010
    %2827 = vmatpush1.bf16.msra.mxu0 %v2009
    %2828 = vmatprep.subr.bf16.mxu0 %v2012
    %2829 = vmatpush1.bf16.msra.mxu0 %v2011
    %2830 = vmatprep.subr.bf16.mxu0 %v2014
    %2831 = vmatpush1.bf16.msra.mxu0 %v2013
    %2832 = vmatprep.subr.bf16.mxu0 %v2016
    %2833 = vmatpush1.bf16.msra.mxu0 %v2015
    %2834 = vmatprep.mubr.bf16.mxu0 %v566
    %2835 = vmatmul.mubr.bf16.gmra.mrb[0].mxu0 %v565
    %v2836 = vpop.f32.mrb[0].mxu0
    %v2837 = vadd.f32 %v2796, %v2836
    %v2838 = vpop.f32.mrb[0].mxu0
    %v2839 = vadd.f32 %v2798, %v2838
    %v2840 = vpop.f32.mrb[0].mxu0
    %v2841 = vpop.f32.mrb[0].mxu0
    %2842 = vdwg.mxu0
    %2843 = vmatprep.subr.bf16.mxu0 %v2018
    %2844 = vmatpush1.bf16.msra.mxu0 %v2017
    %2845 = vmatprep.subr.bf16.mxu0 %v2020
    %2846 = vmatpush1.bf16.msra.mxu0 %v2019
    %2847 = vmatprep.subr.bf16.mxu0 %v2022
    %2848 = vmatpush1.bf16.msra.mxu0 %v2021
    %2849 = vmatprep.subr.bf16.mxu0 %v2024
    %2850 = vmatpush1.bf16.msra.mxu0 %v2023
    %2851 = vmatprep.subr.bf16.mxu0 %v2026
    %2852 = vmatpush1.bf16.msra.mxu0 %v2025
    %2853 = vmatprep.subr.bf16.mxu0 %v2028
    %2854 = vmatpush1.bf16.msra.mxu0 %v2027
    %2855 = vmatprep.subr.bf16.mxu0 %v2030
    %2856 = vmatpush1.bf16.msra.mxu0 %v2029
    %2857 = vmatprep.subr.bf16.mxu0 %v2032
    %2858 = vmatpush1.bf16.msra.mxu0 %v2031
    %2859 = vmatprep.subr.bf16.mxu0 %v2034
    %2860 = vmatpush1.bf16.msra.mxu0 %v2033
    %2861 = vmatprep.subr.bf16.mxu0 %v2036
    %2862 = vmatpush1.bf16.msra.mxu0 %v2035
    %2863 = vmatprep.subr.bf16.mxu0 %v2038
    %2864 = vmatpush1.bf16.msra.mxu0 %v2037
    %2865 = vmatprep.subr.bf16.mxu0 %v2040
    %2866 = vmatpush1.bf16.msra.mxu0 %v2039
    %2867 = vmatprep.subr.bf16.mxu0 %v2042
    %2868 = vmatpush1.bf16.msra.mxu0 %v2041
    %2869 = vmatprep.subr.bf16.mxu0 %v2044
    %2870 = vmatpush1.bf16.msra.mxu0 %v2043
    %2871 = vmatprep.subr.bf16.mxu0 %v2046
    %2872 = vmatpush1.bf16.msra.mxu0 %v2045
    %2873 = vmatprep.subr.bf16.mxu0 %v2048
    %2874 = vmatpush1.bf16.msra.mxu0 %v2047
    %2875 = vmatprep.mubr.bf16.mxu0 %v568
    %2876 = vmatmul.mubr.bf16.gmra.mrb[0].mxu0 %v567
    %v2877 = vpop.f32.mrb[0].mxu0
    %v2878 = vadd.f32 %v2837, %v2877
    %v2879 = vpop.f32.mrb[0].mxu0
    %v2880 = vadd.f32 %v2839, %v2879
    %v2881 = vpop.f32.mrb[0].mxu0
    %v2882 = vpop.f32.mrb[0].mxu0
    %2883 = vdwg.mxu0
    %2884 = vmatprep.subr.bf16.mxu0 %v2050
    %2885 = vmatpush1.bf16.msra.mxu0 %v2049
    %2886 = vmatprep.subr.bf16.mxu0 %v2052
    %2887 = vmatpush1.bf16.msra.mxu0 %v2051
    %2888 = vmatprep.subr.bf16.mxu0 %v2054
    %2889 = vmatpush1.bf16.msra.mxu0 %v2053
    %2890 = vmatprep.subr.bf16.mxu0 %v2056
    %2891 = vmatpush1.bf16.msra.mxu0 %v2055
    %2892 = vmatprep.subr.bf16.mxu0 %v2058
    %2893 = vmatpush1.bf16.msra.mxu0 %v2057
    %2894 = vmatprep.subr.bf16.mxu0 %v2060
    %2895 = vmatpush1.bf16.msra.mxu0 %v2059
    %2896 = vmatprep.subr.bf16.mxu0 %v2062
    %2897 = vmatpush1.bf16.msra.mxu0 %v2061
    %2898 = vmatprep.subr.bf16.mxu0 %v2064
    %2899 = vmatpush1.bf16.msra.mxu0 %v2063
    %2900 = vmatprep.subr.bf16.mxu0 0
    %2901 = vmatpush1.bf16.msra.mxu0 0
    %2902 = vmatprep.subr.bf16.mxu0 0
    %2903 = vmatpush1.bf16.msra.mxu0 0
    %2904 = vmatprep.subr.bf16.mxu0 0
    %2905 = vmatpush1.bf16.msra.mxu0 0
    %2906 = vmatprep.subr.bf16.mxu0 0
    %2907 = vmatpush1.bf16.msra.mxu0 0
    %2908 = vmatprep.subr.bf16.mxu0 0
    %2909 = vmatpush1.bf16.msra.mxu0 0
    %2910 = vmatprep.subr.bf16.mxu0 0
    %2911 = vmatpush1.bf16.msra.mxu0 0
    %2912 = vmatprep.subr.bf16.mxu0 0
    %2913 = vmatpush1.bf16.msra.mxu0 0
    %2914 = vmatprep.subr.bf16.mxu0 0
    %2915 = vmatpush1.bf16.msra.mxu0 0
    %2916 = vmatprep.mubr.bf16.mxu0 0
    %2917 = vmatmul.mubr.bf16.gmra.mrb[0].mxu0 %v569
    %v2918 = vpop.f32.mrb[0].mxu0
    %v2919 = vadd.f32 %v2878, %v2918
    %v2920 = vpop.f32.mrb[0].mxu0
    %v2921 = vadd.f32 %v2880, %v2920
    %v2922 = vpop.f32.mrb[0].mxu0
    %v2923 = vpop.f32.mrb[0].mxu0
    %2924 = vdwg.mxu0
    %v2925 = vmax.f32 %v2919, 0.0
    %v2926 = vmax.f32 %v2921, 0.0
    %v2927 = vpack.c.bf16 %v2925, %v2925
    %v2928 = vpack.c.bf16 %v2926, %v2926
    %v2929 = vld [vmem:[#allocation6] sm:$0xff]
    %v2930 = vld [vmem:[#allocation6 + $0x8] sm:$0xff]
    %v2931 = vld [vmem:[#allocation6 + $0x10] sm:$0xff]
    %v2932 = vld [vmem:[#allocation6 + $0x18] sm:$0xff]
    %v2933 = vld [vmem:[#allocation6 + $0x20] sm:$0xff]
    %v2934 = vld [vmem:[#allocation6 + $0x28] sm:$0xff]
    %v2935 = vld [vmem:[#allocation6 + $0x30] sm:$0xff]
    %v2936 = vld [vmem:[#allocation6 + $0x38] sm:$0xff]
    %v2937 = vld [vmem:[#allocation6 + $0x40] sm:$0xff]
    %v2938 = vld [vmem:[#allocation6 + $0x48] sm:$0xff]
    %v2939 = vld [vmem:[#allocation6 + $0x50] sm:$0xff]
    %v2940 = vld [vmem:[#allocation6 + $0x58] sm:$0xff]
    %v2941 = vld [vmem:[#allocation6 + $0x60] sm:$0xff]
    %v2942 = vld [vmem:[#allocation6 + $0x68] sm:$0xff]
    %v2943 = vld [vmem:[#allocation6 + $0x70] sm:$0xff]
    %v2944 = vld [vmem:[#allocation6 + $0x78] sm:$0xff]
    %v2945 = vld [vmem:[#allocation6 + $0x80] sm:$0xff]
    %v2946 = vld [vmem:[#allocation6 + $0x88] sm:$0xff]
    %v2947 = vld [vmem:[#allocation6 + $0x90] sm:$0xff]
    %v2948 = vld [vmem:[#allocation6 + $0x98] sm:$0xff]
    %v2949 = vld [vmem:[#allocation6 + $0xa0] sm:$0xff]
    %v2950 = vld [vmem:[#allocation6 + $0xa8] sm:$0xff]
    %v2951 = vld [vmem:[#allocation6 + $0xb0] sm:$0xff]
    %v2952 = vld [vmem:[#allocation6 + $0xb8] sm:$0xff]
    %v2953 = vld [vmem:[#allocation6 + $0xc0] sm:$0xff]
    %v2954 = vld [vmem:[#allocation6 + $0xc8] sm:$0xff]
    %v2955 = vld [vmem:[#allocation6 + $0xd0] sm:$0xff]
    %v2956 = vld [vmem:[#allocation6 + $0xd8] sm:$0xff]
    %v2957 = vld [vmem:[#allocation6 + $0xe0] sm:$0xff]
    %v2958 = vld [vmem:[#allocation6 + $0xe8] sm:$0xff]
    %v2959 = vld [vmem:[#allocation6 + $0xf0] sm:$0xff]
    %v2960 = vld [vmem:[#allocation6 + $0xf8] sm:$0xff]
    %v2961 = vld [vmem:[#allocation7] sm:$0x3]
    %v2963 = vlaneseq
    %v2964 = vshrl.u32 %v2963, 7
    %v2965 = vsub.s32 0, %v2964
    %v2966 = vrot.slane %v2961, %v2965
    %v2967 = vlaneseq
    %v2968 = vshrl.u32 %v2967, 7
    %v2969 = vsub.s32 1, %v2968
    %v2970 = vrot.slane %v2961, %v2969
    %v3005 = vunpack.c.l.b16 %v2929
    %v3006 = vunpack.c.h.b16 %v2929
    %v3007 = vunpack.c.l.b16 %v2930
    %v3008 = vunpack.c.h.b16 %v2930
    %v3009 = vunpack.c.l.b16 %v2931
    %v3010 = vunpack.c.h.b16 %v2931
    %v3011 = vunpack.c.l.b16 %v2932
    %v3012 = vunpack.c.h.b16 %v2932
    %v3013 = vunpack.c.l.b16 %v2933
    %v3014 = vunpack.c.h.b16 %v2933
    %v3015 = vunpack.c.l.b16 %v2934
    %v3016 = vunpack.c.h.b16 %v2934
    %v3017 = vunpack.c.l.b16 %v2935
    %v3018 = vunpack.c.h.b16 %v2935
    %v3019 = vunpack.c.l.b16 %v2936
    %v3020 = vunpack.c.h.b16 %v2936
    %v3021 = vunpack.c.l.b16 %v2937
    %v3022 = vunpack.c.h.b16 %v2937
    %v3023 = vunpack.c.l.b16 %v2938
    %v3024 = vunpack.c.h.b16 %v2938
    %v3025 = vunpack.c.l.b16 %v2939
    %v3026 = vunpack.c.h.b16 %v2939
    %v3027 = vunpack.c.l.b16 %v2940
    %v3028 = vunpack.c.h.b16 %v2940
    %v3029 = vunpack.c.l.b16 %v2941
    %v3030 = vunpack.c.h.b16 %v2941
    %v3031 = vunpack.c.l.b16 %v2942
    %v3032 = vunpack.c.h.b16 %v2942
    %v3033 = vunpack.c.l.b16 %v2943
    %v3034 = vunpack.c.h.b16 %v2943
    %v3035 = vunpack.c.l.b16 %v2944
    %v3036 = vunpack.c.h.b16 %v2944
    %v3037 = vunpack.c.l.b16 %v2945
    %v3038 = vunpack.c.h.b16 %v2945
    %v3039 = vunpack.c.l.b16 %v2946
    %v3040 = vunpack.c.h.b16 %v2946
    %v3041 = vunpack.c.l.b16 %v2947
    %v3042 = vunpack.c.h.b16 %v2947
    %v3043 = vunpack.c.l.b16 %v2948
    %v3044 = vunpack.c.h.b16 %v2948
    %v3045 = vunpack.c.l.b16 %v2949
    %v3046 = vunpack.c.h.b16 %v2949
    %v3047 = vunpack.c.l.b16 %v2950
    %v3048 = vunpack.c.h.b16 %v2950
    %v3049 = vunpack.c.l.b16 %v2951
    %v3050 = vunpack.c.h.b16 %v2951
    %v3051 = vunpack.c.l.b16 %v2952
    %v3052 = vunpack.c.h.b16 %v2952
    %v3053 = vunpack.c.l.b16 %v2953
    %v3054 = vunpack.c.h.b16 %v2953
    %v3055 = vunpack.c.l.b16 %v2954
    %v3056 = vunpack.c.h.b16 %v2954
    %v3057 = vunpack.c.l.b16 %v2955
    %v3058 = vunpack.c.h.b16 %v2955
    %v3059 = vunpack.c.l.b16 %v2956
    %v3060 = vunpack.c.h.b16 %v2956
    %v3061 = vunpack.c.l.b16 %v2957
    %v3062 = vunpack.c.h.b16 %v2957
    %v3063 = vunpack.c.l.b16 %v2958
    %v3064 = vunpack.c.h.b16 %v2958
    %v3065 = vunpack.c.l.b16 %v2959
    %v3066 = vunpack.c.h.b16 %v2959
    %v3067 = vunpack.c.l.b16 %v2960
    %v3068 = vunpack.c.h.b16 %v2960
    %v3069 = vpack.c.b16 %v3007, %v3005
    %v3070 = vpack.c.b16 %v3008, %v3006
    %v3071 = vpack.c.b16 %v3011, %v3009
    %v3072 = vpack.c.b16 %v3012, %v3010
    %v3073 = vpack.c.b16 %v3015, %v3013
    %v3074 = vpack.c.b16 %v3016, %v3014
    %v3075 = vpack.c.b16 %v3019, %v3017
    %v3076 = vpack.c.b16 %v3020, %v3018
    %v3077 = vpack.c.b16 %v3023, %v3021
    %v3078 = vpack.c.b16 %v3024, %v3022
    %v3079 = vpack.c.b16 %v3027, %v3025
    %v3080 = vpack.c.b16 %v3028, %v3026
    %v3081 = vpack.c.b16 %v3031, %v3029
    %v3082 = vpack.c.b16 %v3032, %v3030
    %v3083 = vpack.c.b16 %v3035, %v3033
    %v3084 = vpack.c.b16 %v3036, %v3034
    %v3085 = vpack.c.b16 %v3039, %v3037
    %v3086 = vpack.c.b16 %v3040, %v3038
    %v3087 = vpack.c.b16 %v3043, %v3041
    %v3088 = vpack.c.b16 %v3044, %v3042
    %v3089 = vpack.c.b16 %v3047, %v3045
    %v3090 = vpack.c.b16 %v3048, %v3046
    %v3091 = vpack.c.b16 %v3051, %v3049
    %v3092 = vpack.c.b16 %v3052, %v3050
    %v3093 = vpack.c.b16 %v3055, %v3053
    %v3094 = vpack.c.b16 %v3056, %v3054
    %v3095 = vpack.c.b16 %v3059, %v3057
    %v3096 = vpack.c.b16 %v3060, %v3058
    %v3097 = vpack.c.b16 %v3063, %v3061
    %v3098 = vpack.c.b16 %v3064, %v3062
    %v3099 = vpack.c.b16 %v3067, %v3065
    %v3100 = vpack.c.b16 %v3068, %v3066
    %3133 = vmatprep.subr.bf16.mxu0 %v3070
    %3134 = vmatpush1.bf16.msra.mxu0 %v3069
    %3135 = vmatprep.subr.bf16.mxu0 %v3072
    %3136 = vmatpush1.bf16.msra.mxu0 %v3071
    %3137 = vmatprep.subr.bf16.mxu0 %v3074
    %3138 = vmatpush1.bf16.msra.mxu0 %v3073
    %3139 = vmatprep.subr.bf16.mxu0 %v3076
    %3140 = vmatpush1.bf16.msra.mxu0 %v3075
    %3141 = vmatprep.subr.bf16.mxu0 %v3078
    %3142 = vmatpush1.bf16.msra.mxu0 %v3077
    %3143 = vmatprep.subr.bf16.mxu0 %v3080
    %3144 = vmatpush1.bf16.msra.mxu0 %v3079
    %3145 = vmatprep.subr.bf16.mxu0 %v3082
    %3146 = vmatpush1.bf16.msra.mxu0 %v3081
    %3147 = vmatprep.subr.bf16.mxu0 %v3084
    %3148 = vmatpush1.bf16.msra.mxu0 %v3083
    %3149 = vmatprep.subr.bf16.mxu0 %v3086
    %3150 = vmatpush1.bf16.msra.mxu0 %v3085
    %3151 = vmatprep.subr.bf16.mxu0 %v3088
    %3152 = vmatpush1.bf16.msra.mxu0 %v3087
    %3153 = vmatprep.subr.bf16.mxu0 %v3090
    %3154 = vmatpush1.bf16.msra.mxu0 %v3089
    %3155 = vmatprep.subr.bf16.mxu0 %v3092
    %3156 = vmatpush1.bf16.msra.mxu0 %v3091
    %3157 = vmatprep.subr.bf16.mxu0 %v3094
    %3158 = vmatpush1.bf16.msra.mxu0 %v3093
    %3159 = vmatprep.subr.bf16.mxu0 %v3096
    %3160 = vmatpush1.bf16.msra.mxu0 %v3095
    %3161 = vmatprep.subr.bf16.mxu0 %v3098
    %3162 = vmatpush1.bf16.msra.mxu0 %v3097
    %3163 = vmatprep.subr.bf16.mxu0 %v3100
    %3164 = vmatpush1.bf16.msra.mxu0 %v3099
    %3165 = vmatprep.mubr.bf16.mxu0 %v2928
    %3166 = vmatmul.mubr.bf16.gmra.mrb[0].mxu0 %v2927
    %v3167 = vpop.f32.mrb[0].mxu0
    %v3168 = vadd.f32 %v2966, %v3167
    %v3169 = vpop.f32.mrb[0].mxu0
    %v3170 = vadd.f32 %v2970, %v3169
    %v3171 = vpop.f32.mrb[0].mxu0
    %v3172 = vpop.f32.mrb[0].mxu0
    %3173 = vdwg.mxu0
    %v3174 = vmax.f32 %v3168, 0.0
    %v3175 = vmax.f32 %v3170, 0.0
    %v3176 = vpack.c.bf16 %v3174, %v3174
    %v3177 = vpack.c.bf16 %v3175, %v3175
    %v3178 = vld [vmem:[#allocation9] sm:$0xf]
    %v3179 = vld [vmem:[#allocation9 + $0x4] sm:$0xf]
    %v3180 = vld [vmem:[#allocation9 + $0x8] sm:$0xf]
    %v3181 = vld [vmem:[#allocation9 + $0xc] sm:$0xf]
    %v3182 = vld [vmem:[#allocation9 + $0x10] sm:$0xf]
    %v3183 = vld [vmem:[#allocation9 + $0x14] sm:$0xf]
    %v3184 = vld [vmem:[#allocation9 + $0x18] sm:$0xf]
    %v3185 = vld [vmem:[#allocation9 + $0x1c] sm:$0xf]
    %v3186 = vld [vmem:[#allocation9 + $0x20] sm:$0xf]
    %v3187 = vld [vmem:[#allocation9 + $0x24] sm:$0xf]
    %v3188 = vld [vmem:[#allocation9 + $0x28] sm:$0xf]
    %v3189 = vld [vmem:[#allocation9 + $0x2c] sm:$0xf]
    %v3190 = vld [vmem:[#allocation9 + $0x30] sm:$0xf]
    %v3191 = vld [vmem:[#allocation9 + $0x34] sm:$0xf]
    %v3192 = vld [vmem:[#allocation9 + $0x38] sm:$0xf]
    %v3193 = vld [vmem:[#allocation9 + $0x3c] sm:$0xf]
    %v3194 = vld [vmem:[#allocation9 + $0x40] sm:$0xf]
    %v3195 = vld [vmem:[#allocation9 + $0x44] sm:$0xf]
    %v3196 = vld [vmem:[#allocation9 + $0x48] sm:$0xf]
    %v3197 = vld [vmem:[#allocation9 + $0x4c] sm:$0xf]
    %v3198 = vld [vmem:[#allocation9 + $0x50] sm:$0xf]
    %v3199 = vld [vmem:[#allocation9 + $0x54] sm:$0xf]
    %v3200 = vld [vmem:[#allocation9 + $0x58] sm:$0xf]
    %v3201 = vld [vmem:[#allocation9 + $0x5c] sm:$0xf]
    %v3202 = vld [vmem:[#allocation9 + $0x60] sm:$0xf]
    %v3203 = vld [vmem:[#allocation9 + $0x64] sm:$0xf]
    %v3204 = vld [vmem:[#allocation9 + $0x68] sm:$0xf]
    %v3205 = vld [vmem:[#allocation9 + $0x6c] sm:$0xf]
    %v3206 = vld [vmem:[#allocation9 + $0x70] sm:$0xf]
    %v3207 = vld [vmem:[#allocation9 + $0x74] sm:$0xf]
    %v3208 = vld [vmem:[#allocation9 + $0x78] sm:$0xf]
    %v3209 = vld [vmem:[#allocation9 + $0x7c] sm:$0xf]
    %v3210 = vld [vmem:[#allocation10] sm:$0x1]
    %v3212 = vlaneseq
    %v3213 = vshrl.u32 %v3212, 7
    %v3214 = vsub.s32 0, %v3213
    %v3215 = vrot.slane %v3210, %v3214
    %v3249 = vunpack.c.l.b16 %v3178
    %v3250 = vunpack.c.l.b16 %v3179
    %v3251 = vunpack.c.l.b16 %v3180
    %v3252 = vunpack.c.l.b16 %v3181
    %v3253 = vunpack.c.l.b16 %v3182
    %v3254 = vunpack.c.l.b16 %v3183
    %v3255 = vunpack.c.l.b16 %v3184
    %v3256 = vunpack.c.l.b16 %v3185
    %v3257 = vunpack.c.l.b16 %v3186
    %v3258 = vunpack.c.l.b16 %v3187
    %v3259 = vunpack.c.l.b16 %v3188
    %v3260 = vunpack.c.l.b16 %v3189
    %v3261 = vunpack.c.l.b16 %v3190
    %v3262 = vunpack.c.l.b16 %v3191
    %v3263 = vunpack.c.l.b16 %v3192
    %v3264 = vunpack.c.l.b16 %v3193
    %v3265 = vunpack.c.l.b16 %v3194
    %v3266 = vunpack.c.l.b16 %v3195
    %v3267 = vunpack.c.l.b16 %v3196
    %v3268 = vunpack.c.l.b16 %v3197
    %v3269 = vunpack.c.l.b16 %v3198
    %v3270 = vunpack.c.l.b16 %v3199
    %v3271 = vunpack.c.l.b16 %v3200
    %v3272 = vunpack.c.l.b16 %v3201
    %v3273 = vunpack.c.l.b16 %v3202
    %v3274 = vunpack.c.l.b16 %v3203
    %v3275 = vunpack.c.l.b16 %v3204
    %v3276 = vunpack.c.l.b16 %v3205
    %v3277 = vunpack.c.l.b16 %v3206
    %v3278 = vunpack.c.l.b16 %v3207
    %v3279 = vunpack.c.l.b16 %v3208
    %v3280 = vunpack.c.l.b16 %v3209
    %v3281 = vpack.c.b16 %v3250, %v3249
    %v3282 = vpack.c.b16 %v3252, %v3251
    %v3283 = vpack.c.b16 %v3254, %v3253
    %v3284 = vpack.c.b16 %v3256, %v3255
    %v3285 = vpack.c.b16 %v3258, %v3257
    %v3286 = vpack.c.b16 %v3260, %v3259
    %v3287 = vpack.c.b16 %v3262, %v3261
    %v3288 = vpack.c.b16 %v3264, %v3263
    %v3289 = vpack.c.b16 %v3266, %v3265
    %v3290 = vpack.c.b16 %v3268, %v3267
    %v3291 = vpack.c.b16 %v3270, %v3269
    %v3292 = vpack.c.b16 %v3272, %v3271
    %v3293 = vpack.c.b16 %v3274, %v3273
    %v3294 = vpack.c.b16 %v3276, %v3275
    %v3295 = vpack.c.b16 %v3278, %v3277
    %v3296 = vpack.c.b16 %v3280, %v3279
    %3313 = vmatprep.subr.bf16.mxu0 0
    %3314 = vmatpush1.bf16.msra.mxu0 %v3281
    %3315 = vmatprep.subr.bf16.mxu0 0
    %3316 = vmatpush1.bf16.msra.mxu0 %v3282
    %3317 = vmatprep.subr.bf16.mxu0 0
    %3318 = vmatpush1.bf16.msra.mxu0 %v3283
    %3319 = vmatprep.subr.bf16.mxu0 0
    %3320 = vmatpush1.bf16.msra.mxu0 %v3284
    %3321 = vmatprep.subr.bf16.mxu0 0
    %3322 = vmatpush1.bf16.msra.mxu0 %v3285
    %3323 = vmatprep.subr.bf16.mxu0 0
    %3324 = vmatpush1.bf16.msra.mxu0 %v3286
    %3325 = vmatprep.subr.bf16.mxu0 0
    %3326 = vmatpush1.bf16.msra.mxu0 %v3287
    %3327 = vmatprep.subr.bf16.mxu0 0
    %3328 = vmatpush1.bf16.msra.mxu0 %v3288
    %3329 = vmatprep.subr.bf16.mxu0 0
    %3330 = vmatpush1.bf16.msra.mxu0 %v3289
    %3331 = vmatprep.subr.bf16.mxu0 0
    %3332 = vmatpush1.bf16.msra.mxu0 %v3290
    %3333 = vmatprep.subr.bf16.mxu0 0
    %3334 = vmatpush1.bf16.msra.mxu0 %v3291
    %3335 = vmatprep.subr.bf16.mxu0 0
    %3336 = vmatpush1.bf16.msra.mxu0 %v3292
    %3337 = vmatprep.subr.bf16.mxu0 0
    %3338 = vmatpush1.bf16.msra.mxu0 %v3293
    %3339 = vmatprep.subr.bf16.mxu0 0
    %3340 = vmatpush1.bf16.msra.mxu0 %v3294
    %3341 = vmatprep.subr.bf16.mxu0 0
    %3342 = vmatpush1.bf16.msra.mxu0 %v3295
    %3343 = vmatprep.subr.bf16.mxu0 0
    %3344 = vmatpush1.bf16.msra.mxu0 %v3296
    %3345 = vmatprep.mubr.bf16.mxu0 %v3177
    %3346 = vmatmul.mubr.bf16.gmra.mrb[0].mxu0 %v3176
    %v3347 = vpop.f32.mrb[0].mxu0
    %v3348 = vadd.f32 %v3215, %v3347
    %v3349 = vpop.f32.mrb[0].mxu0
    %v3350 = vpop.f32.mrb[0].mxu0
    %v3351 = vpop.f32.mrb[0].mxu0
    %3352 = vdwg.mxu0
    %v3353 = vmax.f32 %v3348, 0.0
    %v3354 = vpack.c.bf16 %v3353, %v3353
    %v3355 = vld [vmem:[%s7] sm:$0xf]
    %v3356 = vld [vmem:[%s7 + $0x4] sm:$0xf]
    %v3357 = vld [vmem:[%s7 + $0x8] sm:$0xf]
    %v3358 = vld [vmem:[%s7 + $0xc] sm:$0xf]
    %v3359 = vld [vmem:[%s7 + $0x10] sm:$0xf]
    %v3360 = vld [vmem:[%s7 + $0x14] sm:$0xf]
    %v3361 = vld [vmem:[%s7 + $0x18] sm:$0xf]
    %v3362 = vld [vmem:[%s7 + $0x1c] sm:$0xf]
    %v3363 = vld [vmem:[%s7 + $0x20] sm:$0xf]
    %v3364 = vld [vmem:[%s7 + $0x24] sm:$0xf]
    %v3365 = vld [vmem:[%s7 + $0x28] sm:$0xf]
    %v3366 = vld [vmem:[%s7 + $0x2c] sm:$0xf]
    %v3367 = vld [vmem:[%s7 + $0x30] sm:$0xf]
    %v3368 = vld [vmem:[%s7 + $0x34] sm:$0xf]
    %v3369 = vld [vmem:[%s7 + $0x38] sm:$0xf]
    %v3370 = vld [vmem:[%s7 + $0x3c] sm:$0xf]
    %v3371 = vld [vmem:[#allocation12] sm:$0x1]
    %v3373 = vlaneseq
    %v3374 = vshrl.u32 %v3373, 7
    %v3375 = vsub.s32 0, %v3374
    %v3376 = vrot.slane %v3371, %v3375
    %v3394 = vunpack.c.l.b16 %v3355
    %v3395 = vunpack.c.l.b16 %v3356
    %v3396 = vunpack.c.l.b16 %v3357
    %v3397 = vunpack.c.l.b16 %v3358
    %v3398 = vunpack.c.l.b16 %v3359
    %v3399 = vunpack.c.l.b16 %v3360
    %v3400 = vunpack.c.l.b16 %v3361
    %v3401 = vunpack.c.l.b16 %v3362
    %v3402 = vunpack.c.l.b16 %v3363
    %v3403 = vunpack.c.l.b16 %v3364
    %v3404 = vunpack.c.l.b16 %v3365
    %v3405 = vunpack.c.l.b16 %v3366
    %v3406 = vunpack.c.l.b16 %v3367
    %v3407 = vunpack.c.l.b16 %v3368
    %v3408 = vunpack.c.l.b16 %v3369
    %v3409 = vunpack.c.l.b16 %v3370
    %v3410 = vpack.c.b16 %v3395, %v3394
    %v3411 = vpack.c.b16 %v3397, %v3396
    %v3412 = vpack.c.b16 %v3399, %v3398
    %v3413 = vpack.c.b16 %v3401, %v3400
    %v3414 = vpack.c.b16 %v3403, %v3402
    %v3415 = vpack.c.b16 %v3405, %v3404
    %v3416 = vpack.c.b16 %v3407, %v3406
    %v3417 = vpack.c.b16 %v3409, %v3408
    %3426 = vmatprep.subr.bf16.mxu0 0
    %3427 = vmatpush1.bf16.msra.mxu0 %v3410
    %3428 = vmatprep.subr.bf16.mxu0 0
    %3429 = vmatpush1.bf16.msra.mxu0 %v3411
    %3430 = vmatprep.subr.bf16.mxu0 0
    %3431 = vmatpush1.bf16.msra.mxu0 %v3412
    %3432 = vmatprep.subr.bf16.mxu0 0
    %3433 = vmatpush1.bf16.msra.mxu0 %v3413
    %3434 = vmatprep.subr.bf16.mxu0 0
    %3435 = vmatpush1.bf16.msra.mxu0 %v3414
    %3436 = vmatprep.subr.bf16.mxu0 0
    %3437 = vmatpush1.bf16.msra.mxu0 %v3415
    %3438 = vmatprep.subr.bf16.mxu0 0
    %3439 = vmatpush1.bf16.msra.mxu0 %v3416
    %3440 = vmatprep.subr.bf16.mxu0 0
    %3441 = vmatpush1.bf16.msra.mxu0 %v3417
    %3442 = vmatprep.subr.bf16.mxu0 0
    %3443 = vmatpush1.bf16.msra.mxu0 0
    %3444 = vmatprep.subr.bf16.mxu0 0
    %3445 = vmatpush1.bf16.msra.mxu0 0
    %3446 = vmatprep.subr.bf16.mxu0 0
    %3447 = vmatpush1.bf16.msra.mxu0 0
    %3448 = vmatprep.subr.bf16.mxu0 0
    %3449 = vmatpush1.bf16.msra.mxu0 0
    %3450 = vmatprep.subr.bf16.mxu0 0
    %3451 = vmatpush1.bf16.msra.mxu0 0
    %3452 = vmatprep.subr.bf16.mxu0 0
    %3453 = vmatpush1.bf16.msra.mxu0 0
    %3454 = vmatprep.subr.bf16.mxu0 0
    %3455 = vmatpush1.bf16.msra.mxu0 0
    %3456 = vmatprep.subr.bf16.mxu0 0
    %3457 = vmatpush1.bf16.msra.mxu0 0
    %3458 = vmatprep.mubr.bf16.mxu0 0
    %3459 = vmatmul.mubr.bf16.gmra.mrb[0].mxu0 %v3354
    %v3460 = vpop.f32.mrb[0].mxu0
    %v3461 = vadd.f32 %v3376, %v3460
    %v3462 = vpop.f32.mrb[0].mxu0
    %v3463 = vpop.f32.mrb[0].mxu0
    %v3464 = vpop.f32.mrb[0].mxu0
    %3465 = vdwg.mxu0
    %vm3466 = vcmask 31744
    %3467 = vst.msk [vmem:[%s9] sm:$0xff] %vm3466, %v3461
    // Predicated region
    $region66: #{neural_net_forward.1} parent=1 // pred_check
      _
    $region67: #{neural_net_forward.1} parent=1 // pred_check_branch
      %3469 = sbr.rel (0) target = $region69
    $region68: #{neural_net_forward.1} parent=1 // pred_region
      _
    $region69: #{neural_net_forward.1} parent=1 // pred_fallthru
      _
    // Predicated region
    $region70: #{neural_net_forward.1} parent=1 // pred_check
      _
    $region71: #{neural_net_forward.1} parent=1 // pred_check_branch
      %3471 = sbr.rel (0) target = $region73
    $region72: #{neural_net_forward.1} parent=1 // pred_region
      _
    $region73: #{neural_net_forward.1} parent=1 // pred_fallthru
      _
    %3472 = vsyncpa [#allocation3], 1
    %3473 = vsyncpa [#allocation5], 1
    %3474 = vsyncpa [#allocation8], 1
    %3475 = vsyncpa [#allocation11], 1

</llo_original>
